<compile_context>
chip_gen: v6e
topology: v6e:2x2x1
jax: 0.10.0
libtpu: 0.0.40
codegen_flags: <defaults>
</compile_context>

<pallas_src>
import functools

import jax
import jax.numpy as jnp
from jax.experimental import pallas as pl
from jax.experimental.pallas import tpu as pltpu


# ----------------------------------------------------------------------------
# Pallas kernel: full decoder (all layers) for one batch tile.
# ----------------------------------------------------------------------------
def _decoder_kernel(gw_ref, x_ref, s_ref, w1_ref, w2_ref, b1_ref, out_ref, scr_ref,
                    *, num_layers, cheb_k, n_pad, tbh):
    """Layouts inside the kernel (one batch tile of TB samples):
         gw_ref : (N, K*N)              mdt   [G_0 | ... | G_{K-1}]   (N = padded nodes)
         x_ref  : (N, TB*H)       f32         layer-0 input, channels padded to H
         s_ref  : (L, N, TB*H)    f32         initial hidden states
         w1_ref : (L, K, 2*TB*H, 3*TB*H) mdt  block-diag fused [x|s] -> (z, r, cand_x)
         w2_ref : (L, K, TB*H, TB*H)     mdt  block-diag (z*state) -> cand_s
         b1_ref : (L, 1, 3*TB*H)  f32         [bz | br | bc], tiled over batch
         out_ref: (L, N, TB*H)    f32
         scr_ref: (K*N, 3*TB*H)   mdt         k-stacked activations (graph-matmul RHS)
       Activation lane order is (batch, hidden); dense/graph output lane order is
       (gate, batch, hidden), so every gate slab is a contiguous lane slice.
    """
    mdt = w1_ref.dtype
    f32 = jnp.float32

    cur = x_ref[...]                                               # (N, TB*H) f32
    for l in range(num_layers):
        s = s_ref[l]                                               # (N, TB*H) f32
        xs = jnp.concatenate([cur, s], axis=1).astype(mdt)         # (N, 2*TB*H)

        # ---- dense pass 1: fused (z, r, cand_x) projection, straight into scratch ----
        for k in range(cheb_k):
            d1 = jnp.dot(xs, w1_ref[l, k], preferred_element_type=f32)   # (N, 3*TB*H)
            scr_ref[k * n_pad:(k + 1) * n_pad, :] = d1.astype(mdt)

        # ---- graph pass 1: ONE (N, K*N) x (K*N, 3*TB*H) MXU matmul --------------------
        g1 = jnp.dot(gw_ref[...], scr_ref[...], preferred_element_type=f32) + b1_ref[l]
        z = jax.nn.sigmoid(g1[:, :tbh])                            # (N, TB*H)
        r = jax.nn.sigmoid(g1[:, tbh:2 * tbh])
        cx = g1[:, 2 * tbh:]                                       # candidate x-part (+ bc)

        # ---- dense pass 2: candidate state-side projection of z*state ----------------
        zs = (z * s).astype(mdt)
        for k in range(cheb_k):
            d2 = jnp.dot(zs, w2_ref[l, k], preferred_element_type=f32)   # (N, TB*H)
            scr_ref[k * n_pad:(k + 1) * n_pad, :tbh] = d2.astype(mdt)

        # ---- graph pass 2 + GRU mix (all elementwise math in f32 on the VPU) ---------
        g2 = jnp.dot(gw_ref[...], scr_ref[:, :tbh], preferred_element_type=f32)
        hc = jnp.tanh(g2 + cx)
        h = r * s + (1.0 - r) * hc                                 # (N, TB*H)
        out_ref[l] = h
        cur = h                                                    # feeds next layer


# ----------------------------------------------------------------------------
# Wrapper helpers: weight restructuring, padding, tile selection.
# ----------------------------------------------------------------------------
def _round_up(x, m):
    return ((x + m - 1) // m) * m


def _split_gconv_weight(w, din, hidden, cheb_k):
    """w: (cheb_k*(din+hidden), out). Returns x-rows (K, H, out) (zero-padded) and
    state-rows (K, H, out), matching the torch concat([x, state]) row layout."""
    out_dim = w.shape[-1]
    w3 = w.reshape(cheb_k, din + hidden, out_dim)
    w_x, w_s = w3[:, :din, :], w3[:, din:, :]
    if din < hidden:
        w_x = jnp.pad(w_x, ((0, 0), (0, hidden - din), (0, 0)))
    return w_x, w_s


def _pick_batch_tile(batch, hidden, *, lane_multiple=128, max_lane_tile=256, min_grid=2):
    """Pick TB s.t. TB | B and TB*H is lane-aligned (multiple of 128) unless TB==B.
    Prefer (weights fit, >= min_grid steps for v7x's 2 TensorCores, largest tile)."""
    best, best_score = batch, (-1, -1, -1)
    for tb in range(1, batch + 1):
        if batch % tb:
            continue
        if (tb * hidden) % lane_multiple and tb != batch:
            continue
        score = (int(tb * hidden <= max_lane_tile), int(batch // tb >= min_grid), tb)
        if score > best_score:
            best, best_score = tb, score
    return best


def cheb_polynomials(support, cheb_k):
    """support: (N, N). Returns (cheb_k, N, N) stack [I, A, 2*A*T1 - T0, ...]."""
    assert cheb_k >= 2, "cheb_k >= 2 (matches the reference weight shapes)"
    n = support.shape[0]
    terms = [jnp.eye(n, dtype=support.dtype), support]
    for _ in range(2, cheb_k):
        terms.append(2.0 * support @ terms[-1] - terms[-2])
    return jnp.stack(terms, axis=0)


# ----------------------------------------------------------------------------
# Forward wrapper: layout prep + pallas_call.
# ----------------------------------------------------------------------------
def decoder_forward(xt, init_state, support, params, *, cheb_k, dim_out,
                    batch_tile=None, matmul_dtype=jnp.bfloat16,
                    min_grid=2, max_lane_tile=256):
    """xt: (B, N, dim_in); init_state: (L, B, N, dim_out); support: (N, N).
    Returns (current_inputs, list_of_hidden) exactly like the torch module."""
    B, N, dim_in = xt.shape
    L = len(params)
    H, K = dim_out, cheb_k
    assert dim_in <= H, "fused kernel pads layer-0 channels up to dim_out"
    assert init_state.shape == (L, B, N, H)

    n_pad = max(_round_up(N, 8), 8)
    if batch_tile is None:
        TB = _pick_batch_tile(B, H, max_lane_tile=max_lane_tile, min_grid=min_grid)
    else:
        TB = batch_tile
        assert B % TB == 0 and ((TB * H) % 128 == 0 or TB == B)
    TBH = TB * H
    grid = (B // TB,)

    # --- graphs: [G_0 | ... | G_{K-1}] along lanes, zero-padded to n_pad -----------
    cheb = cheb_polynomials(support.astype(jnp.float32), K)          # (K, N, N)
    cheb = jnp.pad(cheb, ((0, 0), (0, n_pad - N), (0, n_pad - N)))
    g_wide = jnp.transpose(cheb, (1, 0, 2)).reshape(n_pad, K * n_pad).astype(matmul_dtype)

    # --- activations: node on sublanes, (batch, hidden) on lanes -------------------
    x_pad = jnp.pad(xt.astype(jnp.float32),
                    ((0, 0), (0, n_pad - N), (0, H - dim_in)))       # (B, n_pad, H)
    x_nbh = jnp.transpose(x_pad, (1, 0, 2)).reshape(n_pad, B * H)
    s_pad = jnp.pad(init_state.astype(jnp.float32),
                    ((0, 0), (0, 0), (0, n_pad - N), (0, 0)))        # (L, B, n_pad, H)
    s_nbh = jnp.transpose(s_pad, (0, 2, 1, 3)).reshape(L, n_pad, B * H)

    # --- weights: batch-block-diagonal, gate-major output columns ------------------
    eye_tb = jnp.eye(TB, dtype=jnp.float32)
    w1_l, w2_l, b1_l = [], [], []
    for i, p in enumerate(params):
        din = dim_in if i == 0 else H
        gx, gs = _split_gconv_weight(p["gate_w"], din, H, K)     # (K, H, 2H)
        ux, us = _split_gconv_weight(p["update_w"], din, H, K)   # (K, H, H)
        # per-source (K, H, 3, H) with gate order (z, r, cand); cand has no state input
        wx = jnp.stack([gx[..., :H], gx[..., H:], ux], axis=2)
        ws = jnp.stack([gs[..., :H], gs[..., H:], jnp.zeros_like(us)], axis=2)
        wsrc = jnp.stack([wx, ws], axis=0)                        # (2, K, H, 3, H)
        # block-diag over batch: rows (src, b, c), cols (gate, b, o)
        w1 = jnp.einsum('skcgo,be->ksbcgeo', wsrc, eye_tb)        # (K,2,TB,H,3,TB,H)
        w1_l.append(w1.reshape(K, 2 * TBH, 3 * TBH))
        w2 = jnp.einsum('kco,be->kbceo', us, eye_tb)              # (K,TB,H,TB,H)
        w2_l.append(w2.reshape(K, TBH, TBH))
        gb = p["gate_b"].reshape(-1).astype(jnp.float32)
        ub = p["update_b"].reshape(-1).astype(jnp.float32)
        b1_l.append(jnp.concatenate(
            [jnp.tile(gb[:H], TB), jnp.tile(gb[H:], TB), jnp.tile(ub, TB)]
        ).reshape(1, 3 * TBH))

    w1 = jnp.stack(w1_l).astype(matmul_dtype)     # (L, K, 2*TBH, 3*TBH)
    w2 = jnp.stack(w2_l).astype(matmul_dtype)     # (L, K, TBH, TBH)
    b1 = jnp.stack(b1_l)                          # (L, 1, 3*TBH) f32

    kernel = functools.partial(_decoder_kernel, num_layers=L, cheb_k=K,
                               n_pad=n_pad, tbh=TBH)

    out_flat = pl.pallas_call(
        kernel,
        out_shape=jax.ShapeDtypeStruct((L, n_pad, B * H), jnp.float32),
        grid=grid,
        in_specs=[
            pl.BlockSpec((n_pad, K * n_pad), lambda g: (0, 0)),            # graphs
            pl.BlockSpec((n_pad, TBH), lambda g: (0, g)),                  # x (padded)
            pl.BlockSpec((L, n_pad, TBH), lambda g: (0, 0, g)),            # init states
            pl.BlockSpec((L, K, 2 * TBH, 3 * TBH), lambda g: (0, 0, 0, 0)),  # W1 fused
            pl.BlockSpec((L, K, TBH, TBH), lambda g: (0, 0, 0, 0)),        # W2 cand_s
            pl.BlockSpec((L, 1, 3 * TBH), lambda g: (0, 0, 0)),            # biases
        ],
        out_specs=pl.BlockSpec((L, n_pad, TBH), lambda g: (0, 0, g)),
        scratch_shapes=[pltpu.VMEM((K * n_pad, 3 * TBH), matmul_dtype)],
        compiler_params=pltpu.CompilerParams(
            dimension_semantics=("parallel",),
            vmem_limit_bytes=64 * 1024 * 1024),
    )(g_wide, x_nbh, s_nbh, w1, w2, b1)

    out = out_flat.reshape(L, n_pad, B, H)[:, :N].transpose(0, 2, 1, 3)    # (L, B, N, H)
    hidden = [out[i] for i in range(L)]
    return out[L - 1], hidden


# ----------------------------------------------------------------------------
# Parameter init (matches the torch module's xavier_normal / zero-bias).
# ----------------------------------------------------------------------------
def xavier_normal(key, shape):
    fan_in, fan_out = shape[1], shape[0]
    std = (2.0 / (fan_in + fan_out)) ** 0.5
    return std * jax.random.normal(key, shape, dtype=jnp.float32)


def init_decoder_params(key, node_num, dim_in, dim_out, cheb_k, num_layers):
    params = []
    for i in range(num_layers):
        din = dim_in if i == 0 else dim_out
        kin = cheb_k * (din + dim_out)
        key, k1, k2 = jax.random.split(key, 3)
        params.append(dict(
            gate_w=xavier_normal(k1, (kin, 2 * dim_out)),
            gate_b=jnp.zeros((1, 2 * dim_out), jnp.float32),
            update_w=xavier_normal(k2, (kin, dim_out)),
            update_b=jnp.zeros((1, dim_out), jnp.float32),
        ))
    return params


# ----------------------------------------------------------------------------
# Pure-JAX reference (mirrors the torch code) for correctness checking.
# ----------------------------------------------------------------------------
def _agcn_ref(x, graphs, w, b):
    x_g = jnp.concatenate(
        [jnp.einsum("nm,bmc->bnc", graphs[k], x) for k in range(graphs.shape[0])],
        axis=-1)
    return jnp.einsum("bni,io->bno", x_g, w) + b


def _cell_ref(x, state, graphs, p, hidden):
    xs = jnp.concatenate([x, state], axis=-1)
    z_r = jax.nn.sigmoid(_agcn_ref(xs, graphs, p["gate_w"], p["gate_b"]))
    z, r = z_r[..., :hidden], z_r[..., hidden:]
    cand = jnp.concatenate([x, z * state], axis=-1)
    hc = jnp.tanh(_agcn_ref(cand, graphs, p["update_w"], p["update_b"]))
    return r * state + (1.0 - r) * hc


def _decoder_ref(xt, init_state, support, params, *, cheb_k, dim_out):
    graphs = cheb_polynomials(support, cheb_k)
    current = xt
    hidden = []
    for i, p in enumerate(params):
        h = _cell_ref(current, init_state[i], graphs, p, dim_out)
        hidden.append(h)
        current = h
    return current, hidden


# ----------------------------------------------------------------------------
if __name__ == "__main__":
    key = jax.random.PRNGKey(0)

    # ---------------- config 1: B=2, N=16, din=4, H=32, K=2, L=2 ----------------
    B, N, dim_in, dim_out, cheb_k, num_layers = 2, 16, 4, 32, 2, 2
    key, kx, ks, ka, kp = jax.random.split(key, 5)
    xt = jax.random.normal(kx, (B, N, dim_in), dtype=jnp.float32)
    init_state = jax.random.normal(ks, (num_layers, B, N, dim_out), dtype=jnp.float32)
    adj = jax.nn.softmax(jax.random.normal(ka, (N, N), dtype=jnp.float32), axis=-1)
    params = init_decoder_params(kp, N, dim_in, dim_out, cheb_k, num_layers)

    ref_out, ref_hidden = _decoder_ref(xt, init_state, adj, params,
                                       cheb_k=cheb_k, dim_out=dim_out)

    # f32 MXU path (tight tolerance vs. the reference)
    out, hidden = decoder_forward(xt, init_state, adj, params,
                                  cheb_k=cheb_k, dim_out=dim_out,
                                  matmul_dtype=jnp.float32)
    out = jax.block_until_ready(out)
    hidden = [jax.block_until_ready(h) for h in hidden]
    assert out.shape == (B, N, dim_out)
    assert len(hidden) == num_layers
    assert jnp.allclose(out, ref_out, atol=1e-4, rtol=1e-4)
    for h, rh in zip(hidden, ref_hidden):
        assert jnp.allclose(h, rh, atol=1e-4, rtol=1e-4)

    # default (bf16 MXU operands / f32 accumulation) fast path
    out_bf16, _ = decoder_forward(xt, init_state, adj, params,
                                  cheb_k=cheb_k, dim_out=dim_out)
    out_bf16 = jax.block_until_ready(out_bf16)
    assert jnp.allclose(out_bf16, ref_out, atol=5e-2, rtol=5e-2)

    # --------- config 2: non-multiple-of-8 N, grid > 1, K=3 (padding path) ------
    B2, N2, din2, H2, K2, L2 = 8, 13, 2, 32, 3, 1
    key, kx2, ks2, ka2, kp2 = jax.random.split(key, 5)
    xt2 = jax.random.normal(kx2, (B2, N2, din2), dtype=jnp.float32)
    st2 = jax.random.normal(ks2, (L2, B2, N2, H2), dtype=jnp.float32)
    adj2 = jax.nn.softmax(jax.random.normal(ka2, (N2, N2), dtype=jnp.float32), axis=-1)
    params2 = init_decoder_params(kp2, N2, din2, H2, K2, L2)

    out2, hidden2 = decoder_forward(xt2, st2, adj2, params2,
                                    cheb_k=K2, dim_out=H2,
                                    matmul_dtype=jnp.float32)
    out2 = jax.block_until_ready(out2)
    ref_out2, ref_hidden2 = _decoder_ref(xt2, st2, adj2, params2,
                                         cheb_k=K2, dim_out=H2)
    assert out2.shape == (B2, N2, H2)
    assert jnp.allclose(out2, ref_out2, atol=1e-4, rtol=1e-4)
    for h, rh in zip(hidden2, ref_hidden2):
        assert jnp.allclose(h, rh, atol=1e-4, rtol=1e-4)

    print("KERNEL_OK")
</pallas_src>

<mosaic_0001>
module attributes {stable_mosaic.version = 11 : i64} {
  func.func @_decoder_kernel(%arg0: i32, %arg1: memref<16x32xf32, #tpu.memory_space<vmem>>, %arg2: memref<16x64xf32, #tpu.memory_space<vmem>>, %arg3: memref<2x16x64xf32, #tpu.memory_space<vmem>>, %arg4: memref<2x2x128x192xf32, #tpu.memory_space<vmem>>, %arg5: memref<2x2x64x64xf32, #tpu.memory_space<vmem>>, %arg6: memref<2x1x192xf32, #tpu.memory_space<vmem>>, %arg7: memref<2x16x64xf32, #tpu.memory_space<vmem>>, %arg8: memref<32x192xf32, #tpu.memory_space<vmem>>) attributes {dimension_semantics = [#tpu.dimension_semantics<parallel>], iteration_bounds = array<i64: 1>, scalar_prefetch = 0 : i64, scratch_operands = 1 : i64, tpu.core_type = #tpu.core_type<tc>, window_params = [{pipeline_mode = #tpu.pipeline_mode<synchronous>, transform_indices = @transform_0, window_bounds = array<i64: 16, 32>}, {transform_indices = @transform_1, window_bounds = array<i64: 16, 64>}, {transform_indices = @transform_2, window_bounds = array<i64: 2, 16, 64>}, {pipeline_mode = #tpu.pipeline_mode<synchronous>, transform_indices = @transform_3, window_bounds = array<i64: 2, 2, 128, 192>}, {pipeline_mode = #tpu.pipeline_mode<synchronous>, transform_indices = @transform_4, window_bounds = array<i64: 2, 2, 64, 64>}, {pipeline_mode = #tpu.pipeline_mode<synchronous>, transform_indices = @transform_5, window_bounds = array<i64: 2, 1, 192>}, {transform_indices = @transform_6, window_bounds = array<i64: 2, 16, 64>}]} {
    %c0 = arith.constant 0 : index
    %c0_0 = arith.constant 0 : index
    %0 = vector.load %arg2[%c0, %c0_0] : memref<16x64xf32, #tpu.memory_space<vmem>>, vector<16x64xf32>
    %c0_1 = arith.constant 0 : index
    %c0_2 = arith.constant 0 : index
    %c0_3 = arith.constant 0 : index
    %1 = vector.load %arg3[%c0_1, %c0_2, %c0_3] : memref<2x16x64xf32, #tpu.memory_space<vmem>>, vector<1x16x64xf32>
    %2 = vector.shape_cast %1 : vector<1x16x64xf32> to vector<16x64xf32>
    %3 = tpu.concatenate %0, %2 in 1 : vector<16x64xf32>, vector<16x64xf32> -> vector<16x128xf32>
    %c0_4 = arith.constant 0 : index
    %c0_5 = arith.constant 0 : index
    %c0_6 = arith.constant 0 : index
    %c0_7 = arith.constant 0 : index
    %4 = vector.load %arg4[%c0_4, %c0_5, %c0_6, %c0_7] : memref<2x2x128x192xf32, #tpu.memory_space<vmem>>, vector<1x1x128x192xf32>
    %5 = vector.shape_cast %4 : vector<1x1x128x192xf32> to vector<128x192xf32>
    %cst = arith.constant dense<0.000000e+00> : vector<16x192xf32>
    %6 = tpu.matmul %3, %5, %cst {dimension_numbers = #tpu.dot_dimension_numbers<[1], [0], [0], [1], [0, 0, 1, 1], [], []>} : vector<16x128xf32>, vector<128x192xf32>, vector<16x192xf32> -> vector<16x192xf32>
    %c0_8 = arith.constant 0 : index
    %c0_9 = arith.constant 0 : index
    %7 = vector.load %arg8[%c0_8, %c0_9] : memref<32x192xf32, #tpu.memory_space<vmem>>, vector<16x192xf32>
    tpu.vector_store %arg8[%c0_8, %c0_9], %6 {strides = array<i32>} : memref<32x192xf32, #tpu.memory_space<vmem>>, vector<16x192xf32>,
    %c0_10 = arith.constant 0 : index
    %c1 = arith.constant 1 : index
    %c0_11 = arith.constant 0 : index
    %c0_12 = arith.constant 0 : index
    %8 = vector.load %arg4[%c0_10, %c1, %c0_11, %c0_12] : memref<2x2x128x192xf32, #tpu.memory_space<vmem>>, vector<1x1x128x192xf32>
    %9 = vector.shape_cast %8 : vector<1x1x128x192xf32> to vector<128x192xf32>
    %cst_13 = arith.constant dense<0.000000e+00> : vector<16x192xf32>
    %10 = tpu.matmul %3, %9, %cst_13 {dimension_numbers = #tpu.dot_dimension_numbers<[1], [0], [0], [1], [0, 0, 1, 1], [], []>} : vector<16x128xf32>, vector<128x192xf32>, vector<16x192xf32> -> vector<16x192xf32>
    %c16 = arith.constant 16 : index
    %c0_14 = arith.constant 0 : index
    %11 = vector.load %arg8[%c16, %c0_14] : memref<32x192xf32, #tpu.memory_space<vmem>>, vector<16x192xf32>
    tpu.vector_store %arg8[%c16, %c0_14], %10 {strides = array<i32>} : memref<32x192xf32, #tpu.memory_space<vmem>>, vector<16x192xf32>,
    %c0_15 = arith.constant 0 : index
    %c0_16 = arith.constant 0 : index
    %12 = vector.load %arg1[%c0_15, %c0_16] : memref<16x32xf32, #tpu.memory_space<vmem>>, vector<16x32xf32>
    %c0_17 = arith.constant 0 : index
    %c0_18 = arith.constant 0 : index
    %13 = vector.load %arg8[%c0_17, %c0_18] : memref<32x192xf32, #tpu.memory_space<vmem>>, vector<32x192xf32>
    %cst_19 = arith.constant dense<0.000000e+00> : vector<16x192xf32>
    %14 = tpu.matmul %12, %13, %cst_19 {dimension_numbers = #tpu.dot_dimension_numbers<[1], [0], [0], [1], [0, 0, 1, 1], [], []>} : vector<16x32xf32>, vector<32x192xf32>, vector<16x192xf32> -> vector<16x192xf32>
    %c0_20 = arith.constant 0 : index
    %c0_21 = arith.constant 0 : index
    %c0_22 = arith.constant 0 : index
    %15 = vector.load %arg6[%c0_20, %c0_21, %c0_22] : memref<2x1x192xf32, #tpu.memory_space<vmem>>, vector<1x1x192xf32>
    %16 = vector.shape_cast %15 : vector<1x1x192xf32> to vector<1x192xf32>
    %17 = vector.broadcast %16 : vector<1x192xf32> to vector<16x192xf32>
    %18 = arith.addf %14, %17 : vector<16x192xf32>
    %19 = vector.extract_strided_slice %18 {offsets = [0, 0], sizes = [16, 64], strides = [1, 1]} : vector<16x192xf32> to vector<16x64xf32>
    %20 = arith.negf %19 : vector<16x64xf32>
    %21 = math.exp %20 : vector<16x64xf32>
    %cst_23 = arith.constant 1.000000e+00 : f32
    %22 = vector.broadcast %cst_23 : f32 to vector<16x64xf32>
    %23 = arith.addf %22, %21 : vector<16x64xf32>
    %24 = arith.divf %22, %23 : vector<16x64xf32>
    %25 = vector.extract_strided_slice %18 {offsets = [0, 64], sizes = [16, 64], strides = [1, 1]} : vector<16x192xf32> to vector<16x64xf32>
    %26 = arith.negf %25 : vector<16x64xf32>
    %27 = math.exp %26 : vector<16x64xf32>
    %cst_24 = arith.constant 1.000000e+00 : f32
    %28 = vector.broadcast %cst_24 : f32 to vector<16x64xf32>
    %29 = arith.addf %28, %27 : vector<16x64xf32>
    %30 = arith.divf %28, %29 : vector<16x64xf32>
    %31 = vector.extract_strided_slice %18 {offsets = [0, 128], sizes = [16, 64], strides = [1, 1]} : vector<16x192xf32> to vector<16x64xf32>
    %32 = arith.mulf %24, %2 : vector<16x64xf32>
    %c0_25 = arith.constant 0 : index
    %c0_26 = arith.constant 0 : index
    %c0_27 = arith.constant 0 : index
    %c0_28 = arith.constant 0 : index
    %33 = vector.load %arg5[%c0_25, %c0_26, %c0_27, %c0_28] : memref<2x2x64x64xf32, #tpu.memory_space<vmem>>, vector<1x1x64x64xf32>
    %34 = vector.shape_cast %33 : vector<1x1x64x64xf32> to vector<64x64xf32>
    %cst_29 = arith.constant dense<0.000000e+00> : vector<16x64xf32>
    %35 = tpu.matmul %32, %34, %cst_29 {dimension_numbers = #tpu.dot_dimension_numbers<[1], [0], [0], [1], [0, 0, 1, 1], [], []>} : vector<16x64xf32>, vector<64x64xf32>, vector<16x64xf32> -> vector<16x64xf32>
    %c0_30 = arith.constant 0 : index
    %c0_31 = arith.constant 0 : index
    %36 = vector.load %arg8[%c0_30, %c0_31] : memref<32x192xf32, #tpu.memory_space<vmem>>, vector<16x64xf32>
    tpu.vector_store %arg8[%c0_30, %c0_31], %35 {strides = array<i32>} : memref<32x192xf32, #tpu.memory_space<vmem>>, vector<16x64xf32>,
    %c0_32 = arith.constant 0 : index
    %c1_33 = arith.constant 1 : index
    %c0_34 = arith.constant 0 : index
    %c0_35 = arith.constant 0 : index
    %37 = vector.load %arg5[%c0_32, %c1_33, %c0_34, %c0_35] : memref<2x2x64x64xf32, #tpu.memory_space<vmem>>, vector<1x1x64x64xf32>
    %38 = vector.shape_cast %37 : vector<1x1x64x64xf32> to vector<64x64xf32>
    %cst_36 = arith.constant dense<0.000000e+00> : vector<16x64xf32>
    %39 = tpu.matmul %32, %38, %cst_36 {dimension_numbers = #tpu.dot_dimension_numbers<[1], [0], [0], [1], [0, 0, 1, 1], [], []>} : vector<16x64xf32>, vector<64x64xf32>, vector<16x64xf32> -> vector<16x64xf32>
    %c16_37 = arith.constant 16 : index
    %c0_38 = arith.constant 0 : index
    %40 = vector.load %arg8[%c16_37, %c0_38] : memref<32x192xf32, #tpu.memory_space<vmem>>, vector<16x64xf32>
    tpu.vector_store %arg8[%c16_37, %c0_38], %39 {strides = array<i32>} : memref<32x192xf32, #tpu.memory_space<vmem>>, vector<16x64xf32>,
    %c0_39 = arith.constant 0 : index
    %c0_40 = arith.constant 0 : index
    %41 = vector.load %arg1[%c0_39, %c0_40] : memref<16x32xf32, #tpu.memory_space<vmem>>, vector<16x32xf32>
    %c0_41 = arith.constant 0 : index
    %c0_42 = arith.constant 0 : index
    %42 = vector.load %arg8[%c0_41, %c0_42] : memref<32x192xf32, #tpu.memory_space<vmem>>, vector<32x64xf32>
    %cst_43 = arith.constant dense<0.000000e+00> : vector<16x64xf32>
    %43 = tpu.matmul %41, %42, %cst_43 {dimension_numbers = #tpu.dot_dimension_numbers<[1], [0], [0], [1], [0, 0, 1, 1], [], []>} : vector<16x32xf32>, vector<32x64xf32>, vector<16x64xf32> -> vector<16x64xf32>
    %44 = arith.addf %43, %31 : vector<16x64xf32>
    %45 = math.tanh %44 : vector<16x64xf32>
    %46 = arith.mulf %30, %2 : vector<16x64xf32>
    %cst_44 = arith.constant 1.000000e+00 : f32
    %47 = vector.broadcast %cst_44 : f32 to vector<16x64xf32>
    %48 = arith.subf %47, %30 : vector<16x64xf32>
    %49 = arith.mulf %48, %45 : vector<16x64xf32>
    %50 = arith.addf %46, %49 : vector<16x64xf32>
    %c0_45 = arith.constant 0 : index
    %c0_46 = arith.constant 0 : index
    %c0_47 = arith.constant 0 : index
    %51 = vector.load %arg7[%c0_45, %c0_46, %c0_47] : memref<2x16x64xf32, #tpu.memory_space<vmem>>, vector<1x16x64xf32>
    %52 = vector.shape_cast %51 : vector<1x16x64xf32> to vector<16x64xf32>
    %53 = vector.shape_cast %50 : vector<16x64xf32> to vector<1x16x64xf32>
    tpu.vector_store %arg7[%c0_45, %c0_46, %c0_47], %53 {strides = array<i32>} : memref<2x16x64xf32, #tpu.memory_space<vmem>>, vector<1x16x64xf32>,
    %c1_48 = arith.constant 1 : index
    %c0_49 = arith.constant 0 : index
    %c0_50 = arith.constant 0 : index
    %54 = vector.load %arg3[%c1_48, %c0_49, %c0_50] : memref<2x16x64xf32, #tpu.memory_space<vmem>>, vector<1x16x64xf32>
    %55 = vector.shape_cast %54 : vector<1x16x64xf32> to vector<16x64xf32>
    %56 = tpu.concatenate %50, %55 in 1 : vector<16x64xf32>, vector<16x64xf32> -> vector<16x128xf32>
    %c1_51 = arith.constant 1 : index
    %c0_52 = arith.constant 0 : index
    %c0_53 = arith.constant 0 : index
    %c0_54 = arith.constant 0 : index
    %57 = vector.load %arg4[%c1_51, %c0_52, %c0_53, %c0_54] : memref<2x2x128x192xf32, #tpu.memory_space<vmem>>, vector<1x1x128x192xf32>
    %58 = vector.shape_cast %57 : vector<1x1x128x192xf32> to vector<128x192xf32>
    %cst_55 = arith.constant dense<0.000000e+00> : vector<16x192xf32>
    %59 = tpu.matmul %56, %58, %cst_55 {dimension_numbers = #tpu.dot_dimension_numbers<[1], [0], [0], [1], [0, 0, 1, 1], [], []>} : vector<16x128xf32>, vector<128x192xf32>, vector<16x192xf32> -> vector<16x192xf32>
    %c0_56 = arith.constant 0 : index
    %c0_57 = arith.constant 0 : index
    %60 = vector.load %arg8[%c0_56, %c0_57] : memref<32x192xf32, #tpu.memory_space<vmem>>, vector<16x192xf32>
    tpu.vector_store %arg8[%c0_56, %c0_57], %59 {strides = array<i32>} : memref<32x192xf32, #tpu.memory_space<vmem>>, vector<16x192xf32>,
    %c1_58 = arith.constant 1 : index
    %c1_59 = arith.constant 1 : index
    %c0_60 = arith.constant 0 : index
    %c0_61 = arith.constant 0 : index
    %61 = vector.load %arg4[%c1_58, %c1_59, %c0_60, %c0_61] : memref<2x2x128x192xf32, #tpu.memory_space<vmem>>, vector<1x1x128x192xf32>
    %62 = vector.shape_cast %61 : vector<1x1x128x192xf32> to vector<128x192xf32>
    %cst_62 = arith.constant dense<0.000000e+00> : vector<16x192xf32>
    %63 = tpu.matmul %56, %62, %cst_62 {dimension_numbers = #tpu.dot_dimension_numbers<[1], [0], [0], [1], [0, 0, 1, 1], [], []>} : vector<16x128xf32>, vector<128x192xf32>, vector<16x192xf32> -> vector<16x192xf32>
    %c16_63 = arith.constant 16 : index
    %c0_64 = arith.constant 0 : index
    %64 = vector.load %arg8[%c16_63, %c0_64] : memref<32x192xf32, #tpu.memory_space<vmem>>, vector<16x192xf32>
    tpu.vector_store %arg8[%c16_63, %c0_64], %63 {strides = array<i32>} : memref<32x192xf32, #tpu.memory_space<vmem>>, vector<16x192xf32>,
    %c0_65 = arith.constant 0 : index
    %c0_66 = arith.constant 0 : index
    %65 = vector.load %arg1[%c0_65, %c0_66] : memref<16x32xf32, #tpu.memory_space<vmem>>, vector<16x32xf32>
    %c0_67 = arith.constant 0 : index
    %c0_68 = arith.constant 0 : index
    %66 = vector.load %arg8[%c0_67, %c0_68] : memref<32x192xf32, #tpu.memory_space<vmem>>, vector<32x192xf32>
    %cst_69 = arith.constant dense<0.000000e+00> : vector<16x192xf32>
    %67 = tpu.matmul %65, %66, %cst_69 {dimension_numbers = #tpu.dot_dimension_numbers<[1], [0], [0], [1], [0, 0, 1, 1], [], []>} : vector<16x32xf32>, vector<32x192xf32>, vector<16x192xf32> -> vector<16x192xf32>
    %c1_70 = arith.constant 1 : index
    %c0_71 = arith.constant 0 : index
    %c0_72 = arith.constant 0 : index
    %68 = vector.load %arg6[%c1_70, %c0_71, %c0_72] : memref<2x1x192xf32, #tpu.memory_space<vmem>>, vector<1x1x192xf32>
    %69 = vector.shape_cast %68 : vector<1x1x192xf32> to vector<1x192xf32>
    %70 = vector.broadcast %69 : vector<1x192xf32> to vector<16x192xf32>
    %71 = arith.addf %67, %70 : vector<16x192xf32>
    %72 = vector.extract_strided_slice %71 {offsets = [0, 0], sizes = [16, 64], strides = [1, 1]} : vector<16x192xf32> to vector<16x64xf32>
    %73 = arith.negf %72 : vector<16x64xf32>
    %74 = math.exp %73 : vector<16x64xf32>
    %cst_73 = arith.constant 1.000000e+00 : f32
    %75 = vector.broadcast %cst_73 : f32 to vector<16x64xf32>
    %76 = arith.addf %75, %74 : vector<16x64xf32>
    %77 = arith.divf %75, %76 : vector<16x64xf32>
    %78 = vector.extract_strided_slice %71 {offsets = [0, 64], sizes = [16, 64], strides = [1, 1]} : vector<16x192xf32> to vector<16x64xf32>
    %79 = arith.negf %78 : vector<16x64xf32>
    %80 = math.exp %79 : vector<16x64xf32>
    %cst_74 = arith.constant 1.000000e+00 : f32
    %81 = vector.broadcast %cst_74 : f32 to vector<16x64xf32>
    %82 = arith.addf %81, %80 : vector<16x64xf32>
    %83 = arith.divf %81, %82 : vector<16x64xf32>
    %84 = vector.extract_strided_slice %71 {offsets = [0, 128], sizes = [16, 64], strides = [1, 1]} : vector<16x192xf32> to vector<16x64xf32>
    %85 = arith.mulf %77, %55 : vector<16x64xf32>
    %c1_75 = arith.constant 1 : index
    %c0_76 = arith.constant 0 : index
    %c0_77 = arith.constant 0 : index
    %c0_78 = arith.constant 0 : index
    %86 = vector.load %arg5[%c1_75, %c0_76, %c0_77, %c0_78] : memref<2x2x64x64xf32, #tpu.memory_space<vmem>>, vector<1x1x64x64xf32>
    %87 = vector.shape_cast %86 : vector<1x1x64x64xf32> to vector<64x64xf32>
    %cst_79 = arith.constant dense<0.000000e+00> : vector<16x64xf32>
    %88 = tpu.matmul %85, %87, %cst_79 {dimension_numbers = #tpu.dot_dimension_numbers<[1], [0], [0], [1], [0, 0, 1, 1], [], []>} : vector<16x64xf32>, vector<64x64xf32>, vector<16x64xf32> -> vector<16x64xf32>
    %c0_80 = arith.constant 0 : index
    %c0_81 = arith.constant 0 : index
    %89 = vector.load %arg8[%c0_80, %c0_81] : memref<32x192xf32, #tpu.memory_space<vmem>>, vector<16x64xf32>
    tpu.vector_store %arg8[%c0_80, %c0_81], %88 {strides = array<i32>} : memref<32x192xf32, #tpu.memory_space<vmem>>, vector<16x64xf32>,
    %c1_82 = arith.constant 1 : index
    %c1_83 = arith.constant 1 : index
    %c0_84 = arith.constant 0 : index
    %c0_85 = arith.constant 0 : index
    %90 = vector.load %arg5[%c1_82, %c1_83, %c0_84, %c0_85] : memref<2x2x64x64xf32, #tpu.memory_space<vmem>>, vector<1x1x64x64xf32>
    %91 = vector.shape_cast %90 : vector<1x1x64x64xf32> to vector<64x64xf32>
    %cst_86 = arith.constant dense<0.000000e+00> : vector<16x64xf32>
    %92 = tpu.matmul %85, %91, %cst_86 {dimension_numbers = #tpu.dot_dimension_numbers<[1], [0], [0], [1], [0, 0, 1, 1], [], []>} : vector<16x64xf32>, vector<64x64xf32>, vector<16x64xf32> -> vector<16x64xf32>
    %c16_87 = arith.constant 16 : index
    %c0_88 = arith.constant 0 : index
    %93 = vector.load %arg8[%c16_87, %c0_88] : memref<32x192xf32, #tpu.memory_space<vmem>>, vector<16x64xf32>
    tpu.vector_store %arg8[%c16_87, %c0_88], %92 {strides = array<i32>} : memref<32x192xf32, #tpu.memory_space<vmem>>, vector<16x64xf32>,
    %c0_89 = arith.constant 0 : index
    %c0_90 = arith.constant 0 : index
    %94 = vector.load %arg1[%c0_89, %c0_90] : memref<16x32xf32, #tpu.memory_space<vmem>>, vector<16x32xf32>
    %c0_91 = arith.constant 0 : index
    %c0_92 = arith.constant 0 : index
    %95 = vector.load %arg8[%c0_91, %c0_92] : memref<32x192xf32, #tpu.memory_space<vmem>>, vector<32x64xf32>
    %cst_93 = arith.constant dense<0.000000e+00> : vector<16x64xf32>
    %96 = tpu.matmul %94, %95, %cst_93 {dimension_numbers = #tpu.dot_dimension_numbers<[1], [0], [0], [1], [0, 0, 1, 1], [], []>} : vector<16x32xf32>, vector<32x64xf32>, vector<16x64xf32> -> vector<16x64xf32>
    %97 = arith.addf %96, %84 : vector<16x64xf32>
    %98 = math.tanh %97 : vector<16x64xf32>
    %99 = arith.mulf %83, %55 : vector<16x64xf32>
    %cst_94 = arith.constant 1.000000e+00 : f32
    %100 = vector.broadcast %cst_94 : f32 to vector<16x64xf32>
    %101 = arith.subf %100, %83 : vector<16x64xf32>
    %102 = arith.mulf %101, %98 : vector<16x64xf32>
    %103 = arith.addf %99, %102 : vector<16x64xf32>
    %c1_95 = arith.constant 1 : index
    %c0_96 = arith.constant 0 : index
    %c0_97 = arith.constant 0 : index
    %104 = vector.load %arg7[%c1_95, %c0_96, %c0_97] : memref<2x16x64xf32, #tpu.memory_space<vmem>>, vector<1x16x64xf32>
    %105 = vector.shape_cast %104 : vector<1x16x64xf32> to vector<16x64xf32>
    %106 = vector.shape_cast %103 : vector<16x64xf32> to vector<1x16x64xf32>
    tpu.vector_store %arg7[%c1_95, %c0_96, %c0_97], %106 {strides = array<i32>} : memref<2x16x64xf32, #tpu.memory_space<vmem>>, vector<1x16x64xf32>,
    return
  }
  func.func @transform_0(%arg0: i32) -> (i32, i32) {
    %c0_i32 = arith.constant 0 : i32
    %c0_i32_0 = arith.constant 0 : i32
    %c0_i32_1 = arith.constant 0 : i32
    return %c0_i32, %c0_i32_0 : i32, i32
  }
  func.func @transform_1(%arg0: i32) -> (i32, i32) {
    %c0_i32 = arith.constant 0 : i32
    %c0_i32_0 = arith.constant 0 : i32
    return %c0_i32, %arg0 : i32, i32
  }
  func.func @transform_2(%arg0: i32) -> (i32, i32, i32) {
    %c0_i32 = arith.constant 0 : i32
    %c0_i32_0 = arith.constant 0 : i32
    %c0_i32_1 = arith.constant 0 : i32
    return %c0_i32, %c0_i32_0, %arg0 : i32, i32, i32
  }
  func.func @transform_3(%arg0: i32) -> (i32, i32, i32, i32) {
    %c0_i32 = arith.constant 0 : i32
    %c0_i32_0 = arith.constant 0 : i32
    %c0_i32_1 = arith.constant 0 : i32
    %c0_i32_2 = arith.constant 0 : i32
    %c0_i32_3 = arith.constant 0 : i32
    return %c0_i32, %c0_i32_0, %c0_i32_1, %c0_i32_2 : i32, i32, i32, i32
  }
  func.func @transform_4(%arg0: i32) -> (i32, i32, i32, i32) {
    %c0_i32 = arith.constant 0 : i32
    %c0_i32_0 = arith.constant 0 : i32
    %c0_i32_1 = arith.constant 0 : i32
    %c0_i32_2 = arith.constant 0 : i32
    %c0_i32_3 = arith.constant 0 : i32
    return %c0_i32, %c0_i32_0, %c0_i32_1, %c0_i32_2 : i32, i32, i32, i32
  }
  func.func @transform_5(%arg0: i32) -> (i32, i32, i32) {
    %c0_i32 = arith.constant 0 : i32
    %c0_i32_0 = arith.constant 0 : i32
    %c0_i32_1 = arith.constant 0 : i32
    %c0_i32_2 = arith.constant 0 : i32
    return %c0_i32, %c0_i32_0, %c0_i32_1 : i32, i32, i32
  }
  func.func @transform_6(%arg0: i32) -> (i32, i32, i32) {
    %c0_i32 = arith.constant 0 : i32
    %c0_i32_0 = arith.constant 0 : i32
    %c0_i32_1 = arith.constant 0 : i32
    return %c0_i32, %c0_i32_0, %arg0 : i32, i32, i32
  }
}

</mosaic_0001>

<llo_original>
// kernel: tpu_custom_call.1
$region0: #{tpu_custom_call.1}
  #allocation0 [shape = 'u32[]', space=smem, size = 0x4, offset = 0x4, fixed_abs, tag = 'smem constant byte address 0x4 - core index']
  #allocation1 [shape = 'u32[144,128]{1,0:T(1,128)}', space=vmem, size = 0x12000, scoped, tag = 'internal scratch']
  #allocation2 [shape = 'f32[32,192]{1,0:T(8,128)}', space=vmem, size = 0x8000, scoped, tag = 'scratch operand']
  %s0 = inlined_call_operand.vmem [shape: f32[16,32], index: 0, kind: input, shape index: {}]
  %s1 = inlined_call_operand.vmem [shape: f32[16,64], index: 1, kind: input, shape index: {}]
  %s2 = inlined_call_operand.vmem [shape: f32[2,16,64], index: 2, kind: input, shape index: {}]
  %s3 = inlined_call_operand.vmem [shape: f32[2,2,128,192], index: 3, kind: input, shape index: {}]
  %s4 = inlined_call_operand.vmem [shape: f32[2,2,64,64], index: 4, kind: input, shape index: {}]
  %s5 = inlined_call_operand.vmem [shape: f32[2,1,192], index: 5, kind: input, shape index: {}]
  %s6 = inlined_call_operand.hbm [shape: f32[2,16,64], index: 6, kind: output, shape index: {}]
  %s7 = sld [smem:[#allocation0]]
  $region34: #{tpu_custom_call.1} parent=0
    _
  %s9 = ssub.s32 1, %s7
  %s10 = scalar_select 0, %s9, %s7
  $region1: #{tpu_custom_call.1} parent=0
    #allocation3 [shape = 'u8[16384]{0}', space=vmem, size = 0x4000, scoped, tag = 'output window, operand 0, single buffered']
    #allocation4 [shape = 's32[1]{0}', space=sflag, size = 0x4, scoped, tag = 'scoped memory for tpu_custom_call.1']
    %11 = vsyncpa [#allocation4], 0
    // Predicated region
    $region2: #{tpu_custom_call.1} parent=1 // pred_check
      _
    $region3: #{tpu_custom_call.1} parent=1 // pred_check_branch
      %13 = sbr.rel (0) target = $region5
    $region4: #{tpu_custom_call.1} parent=1 // pred_region
      _
    $region5: #{tpu_custom_call.1} parent=1 // pred_fallthru
      _
    // Predicated region
    $region6: #{tpu_custom_call.1} parent=1 // pred_check
      _
    $region7: #{tpu_custom_call.1} parent=1 // pred_check_branch
      %15 = sbr.rel (0) target = $region9
    $region8: #{tpu_custom_call.1} parent=1 // pred_region
      _
    $region9: #{tpu_custom_call.1} parent=1 // pred_fallthru
      _
    // Predicated region
    $region10: #{tpu_custom_call.1} parent=1 // pred_check
      _
    $region11: #{tpu_custom_call.1} parent=1 // pred_check_branch
      %17 = sbr.rel (0) target = $region13
    $region12: #{tpu_custom_call.1} parent=1 // pred_region
      _
    $region13: #{tpu_custom_call.1} parent=1 // pred_fallthru
      _
    // Predicated region
    $region14: #{tpu_custom_call.1} parent=1 // pred_check
      _
    $region15: #{tpu_custom_call.1} parent=1 // pred_check_branch
      %19 = sbr.rel (0) target = $region17
    $region16: #{tpu_custom_call.1} parent=1 // pred_region
      _
    $region17: #{tpu_custom_call.1} parent=1 // pred_fallthru
      _
    // Predicated region
    $region18: #{tpu_custom_call.1} parent=1 // pred_check
      _
    $region19: #{tpu_custom_call.1} parent=1 // pred_check_branch
      %21 = sbr.rel (0) target = $region21
    $region20: #{tpu_custom_call.1} parent=1 // pred_region
      _
    $region21: #{tpu_custom_call.1} parent=1 // pred_fallthru
      _
    // Predicated region
    $region22: #{tpu_custom_call.1} parent=1 // pred_check
      _
    $region23: #{tpu_custom_call.1} parent=1 // pred_check_branch
      %23 = sbr.rel (0) target = $region25
    $region24: #{tpu_custom_call.1} parent=1 // pred_region
      _
    $region25: #{tpu_custom_call.1} parent=1 // pred_fallthru
      _
    %v24 = vld [vmem:[%s1] sm:$0xff]
    %v25 = vld [vmem:[%s1 + $0x8] sm:$0xff]
    %v26 = vld [vmem:[%s2] sm:$0xff]
    %v27 = vld [vmem:[%s2 + $0x8] sm:$0xff]
    %30 = vrot.lane.b32.xlu0 %v26, 64
    %v31 = vpop.permute.xlu0 %30
    %32 = vrot.lane.b32.xlu0 %v27, 64
    %v33 = vpop.permute.xlu0 %32
    %vm36 = vcmask 523264
    %v37 = vsel %vm36, %v24, %v31
    %v38 = vsel %vm36, %v25, %v33
    %v39 = vld [vmem:[%s3] sm:$0xff]
    %v40 = vld [vmem:[%s3 + $0x8] sm:$0xff]
    %v41 = vld [vmem:[%s3 + $0x10] sm:$0xff]
    %v42 = vld [vmem:[%s3 + $0x18] sm:$0xff]
    %v43 = vld [vmem:[%s3 + $0x20] sm:$0xff]
    %v44 = vld [vmem:[%s3 + $0x28] sm:$0xff]
    %v45 = vld [vmem:[%s3 + $0x30] sm:$0xff]
    %v46 = vld [vmem:[%s3 + $0x38] sm:$0xff]
    %v47 = vld [vmem:[%s3 + $0x40] sm:$0xff]
    %v48 = vld [vmem:[%s3 + $0x48] sm:$0xff]
    %v49 = vld [vmem:[%s3 + $0x50] sm:$0xff]
    %v50 = vld [vmem:[%s3 + $0x58] sm:$0xff]
    %v51 = vld [vmem:[%s3 + $0x60] sm:$0xff]
    %v52 = vld [vmem:[%s3 + $0x68] sm:$0xff]
    %v53 = vld [vmem:[%s3 + $0x70] sm:$0xff]
    %v54 = vld [vmem:[%s3 + $0x78] sm:$0xff]
    %v55 = vld [vmem:[%s3 + $0x80] sm:$0xff]
    %v56 = vld [vmem:[%s3 + $0x88] sm:$0xff]
    %v57 = vld [vmem:[%s3 + $0x90] sm:$0xff]
    %v58 = vld [vmem:[%s3 + $0x98] sm:$0xff]
    %v59 = vld [vmem:[%s3 + $0xa0] sm:$0xff]
    %v60 = vld [vmem:[%s3 + $0xa8] sm:$0xff]
    %v61 = vld [vmem:[%s3 + $0xb0] sm:$0xff]
    %v62 = vld [vmem:[%s3 + $0xb8] sm:$0xff]
    %v63 = vld [vmem:[%s3 + $0xc0] sm:$0xff]
    %v64 = vld [vmem:[%s3 + $0xc8] sm:$0xff]
    %v65 = vld [vmem:[%s3 + $0xd0] sm:$0xff]
    %v66 = vld [vmem:[%s3 + $0xd8] sm:$0xff]
    %v67 = vld [vmem:[%s3 + $0xe0] sm:$0xff]
    %v68 = vld [vmem:[%s3 + $0xe8] sm:$0xff]
    %v69 = vld [vmem:[%s3 + $0xf0] sm:$0xff]
    %v70 = vld [vmem:[%s3 + $0xf8] sm:$0xff]
    %71 = vmatprep.subr.mxu0 %v70
    %72 = vmatpush1.msra.mxu0 %v69
    %73 = vmatprep.subr.mxu0 %v68
    %74 = vmatpush1.msra.mxu0 %v67
    %75 = vmatprep.subr.mxu0 %v66
    %76 = vmatpush1.msra.mxu0 %v65
    %77 = vmatprep.subr.mxu0 %v64
    %78 = vmatpush1.msra.mxu0 %v63
    %79 = vmatprep.subr.mxu0 %v62
    %80 = vmatpush1.msra.mxu0 %v61
    %81 = vmatprep.subr.mxu0 %v60
    %82 = vmatpush1.msra.mxu0 %v59
    %83 = vmatprep.subr.mxu0 %v58
    %84 = vmatpush1.msra.mxu0 %v57
    %85 = vmatprep.subr.mxu0 %v56
    %86 = vmatpush1.msra.mxu0 %v55
    %87 = vmatprep.subr.mxu0 %v54
    %88 = vmatpush1.msra.mxu0 %v53
    %89 = vmatprep.subr.mxu0 %v52
    %90 = vmatpush1.msra.mxu0 %v51
    %91 = vmatprep.subr.mxu0 %v50
    %92 = vmatpush1.msra.mxu0 %v49
    %93 = vmatprep.subr.mxu0 %v48
    %94 = vmatpush1.msra.mxu0 %v47
    %95 = vmatprep.subr.mxu0 %v46
    %96 = vmatpush1.msra.mxu0 %v45
    %97 = vmatprep.subr.mxu0 %v44
    %98 = vmatpush1.msra.mxu0 %v43
    %99 = vmatprep.subr.mxu0 %v42
    %100 = vmatpush1.msra.mxu0 %v41
    %101 = vmatprep.subr.mxu0 %v40
    %102 = vmatpush1.msra.mxu0 %v39
    %103 = vmatprep.subr.mxu0 0.0
    %104 = vmatpush2.msra.mxu0 0.0
    %105 = vmatprep.subr.mxu0 0.0
    %106 = vmatpush2.msra.mxu0 0.0
    %107 = vmatprep.subr.mxu0 0.0
    %108 = vmatpush2.msra.mxu0 0.0
    %109 = vmatprep.subr.mxu0 0.0
    %110 = vmatpush2.msra.mxu0 0.0
    %111 = vmatprep.subr.mxu0 0.0
    %112 = vmatpush2.msra.mxu0 0.0
    %113 = vmatprep.subr.mxu0 0.0
    %114 = vmatpush2.msra.mxu0 0.0
    %115 = vmatprep.subr.mxu0 0.0
    %116 = vmatpush2.msra.mxu0 0.0
    %117 = vmatprep.subr.mxu0 0.0
    %118 = vmatpush2.msra.mxu0 0.0
    %119 = vmatprep.subr.mxu0 0.0
    %120 = vmatpush2.msra.mxu0 0.0
    %121 = vmatprep.subr.mxu0 0.0
    %122 = vmatpush2.msra.mxu0 0.0
    %123 = vmatprep.subr.mxu0 0.0
    %124 = vmatpush2.msra.mxu0 0.0
    %125 = vmatprep.subr.mxu0 0.0
    %126 = vmatpush2.msra.mxu0 0.0
    %127 = vmatprep.subr.mxu0 0.0
    %128 = vmatpush2.msra.mxu0 0.0
    %129 = vmatprep.subr.mxu0 0.0
    %130 = vmatpush2.msra.mxu0 0.0
    %131 = vmatprep.subr.mxu0 0.0
    %132 = vmatpush2.msra.mxu0 0.0
    %133 = vmatprep.subr.mxu0 0.0
    %134 = vmatpush2.msra.mxu0 0.0
    %135 = vmatprep.mubr.f32.mxu0 0.0
    %136 = vmatmul.mubr.f32.gmra.mxu0 %v37
    %v137 = vpop.f32.mrf.mxu0
    %v138 = vadd.f32 0.0, %v137
    %v139 = vpop.f32.mrf.mxu0
    %v140 = vadd.f32 0.0, %v139
    %141 = vmatprep.mubr.f32.mxu0 0.0
    %142 = vmatmul.mubr.f32.gmra.mxu0 %v38
    %v143 = vpop.f32.mrf.mxu0
    %v144 = vadd.f32 0.0, %v143
    %v145 = vpop.f32.mrf.mxu0
    %v146 = vadd.f32 0.0, %v145
    %147 = vdwg.mxu0
    %148 = vst [vmem:[#allocation2] sm:$0xff] %v138
    %149 = vst.msk [vmem:[#allocation2 + $0x8] sm:$0xff] %vm36, %v140
    %150 = vst [vmem:[#allocation2 + $0x10] sm:$0xff] %v144
    %151 = vst.msk [vmem:[#allocation2 + $0x18] sm:$0xff] %vm36, %v146
    %s152 = scalar_lea.vmem %s3, 256
    %v153 = vld [vmem:[%s152] sm:$0xff]
    %v154 = vld [vmem:[%s152 + $0x8] sm:$0xff]
    %v155 = vld [vmem:[%s152 + $0x10] sm:$0xff]
    %v156 = vld [vmem:[%s152 + $0x18] sm:$0xff]
    %v157 = vld [vmem:[%s152 + $0x20] sm:$0xff]
    %v158 = vld [vmem:[%s152 + $0x28] sm:$0xff]
    %v159 = vld [vmem:[%s152 + $0x30] sm:$0xff]
    %v160 = vld [vmem:[%s152 + $0x38] sm:$0xff]
    %v161 = vld [vmem:[%s152 + $0x40] sm:$0xff]
    %v162 = vld [vmem:[%s152 + $0x48] sm:$0xff]
    %v163 = vld [vmem:[%s152 + $0x50] sm:$0xff]
    %v164 = vld [vmem:[%s152 + $0x58] sm:$0xff]
    %v165 = vld [vmem:[%s152 + $0x60] sm:$0xff]
    %v166 = vld [vmem:[%s152 + $0x68] sm:$0xff]
    %v167 = vld [vmem:[%s152 + $0x70] sm:$0xff]
    %v168 = vld [vmem:[%s152 + $0x78] sm:$0xff]
    %v169 = vld [vmem:[%s152 + $0x80] sm:$0xff]
    %v170 = vld [vmem:[%s152 + $0x88] sm:$0xff]
    %v171 = vld [vmem:[%s152 + $0x90] sm:$0xff]
    %v172 = vld [vmem:[%s152 + $0x98] sm:$0xff]
    %v173 = vld [vmem:[%s152 + $0xa0] sm:$0xff]
    %v174 = vld [vmem:[%s152 + $0xa8] sm:$0xff]
    %v175 = vld [vmem:[%s152 + $0xb0] sm:$0xff]
    %v176 = vld [vmem:[%s152 + $0xb8] sm:$0xff]
    %v177 = vld [vmem:[%s152 + $0xc0] sm:$0xff]
    %v178 = vld [vmem:[%s152 + $0xc8] sm:$0xff]
    %v179 = vld [vmem:[%s152 + $0xd0] sm:$0xff]
    %v180 = vld [vmem:[%s152 + $0xd8] sm:$0xff]
    %v181 = vld [vmem:[%s152 + $0xe0] sm:$0xff]
    %v182 = vld [vmem:[%s152 + $0xe8] sm:$0xff]
    %v183 = vld [vmem:[%s152 + $0xf0] sm:$0xff]
    %v184 = vld [vmem:[%s152 + $0xf8] sm:$0xff]
    %185 = vmatprep.subr.mxu0 %v184
    %186 = vmatpush1.msra.mxu0 %v183
    %187 = vmatprep.subr.mxu0 %v182
    %188 = vmatpush1.msra.mxu0 %v181
    %189 = vmatprep.subr.mxu0 %v180
    %190 = vmatpush1.msra.mxu0 %v179
    %191 = vmatprep.subr.mxu0 %v178
    %192 = vmatpush1.msra.mxu0 %v177
    %193 = vmatprep.subr.mxu0 %v176
    %194 = vmatpush1.msra.mxu0 %v175
    %195 = vmatprep.subr.mxu0 %v174
    %196 = vmatpush1.msra.mxu0 %v173
    %197 = vmatprep.subr.mxu0 %v172
    %198 = vmatpush1.msra.mxu0 %v171
    %199 = vmatprep.subr.mxu0 %v170
    %200 = vmatpush1.msra.mxu0 %v169
    %201 = vmatprep.subr.mxu0 %v168
    %202 = vmatpush1.msra.mxu0 %v167
    %203 = vmatprep.subr.mxu0 %v166
    %204 = vmatpush1.msra.mxu0 %v165
    %205 = vmatprep.subr.mxu0 %v164
    %206 = vmatpush1.msra.mxu0 %v163
    %207 = vmatprep.subr.mxu0 %v162
    %208 = vmatpush1.msra.mxu0 %v161
    %209 = vmatprep.subr.mxu0 %v160
    %210 = vmatpush1.msra.mxu0 %v159
    %211 = vmatprep.subr.mxu0 %v158
    %212 = vmatpush1.msra.mxu0 %v157
    %213 = vmatprep.subr.mxu0 %v156
    %214 = vmatpush1.msra.mxu0 %v155
    %215 = vmatprep.subr.mxu0 %v154
    %216 = vmatpush1.msra.mxu0 %v153
    %217 = vmatprep.subr.mxu0 0.0
    %218 = vmatpush2.msra.mxu0 0.0
    %219 = vmatprep.subr.mxu0 0.0
    %220 = vmatpush2.msra.mxu0 0.0
    %221 = vmatprep.subr.mxu0 0.0
    %222 = vmatpush2.msra.mxu0 0.0
    %223 = vmatprep.subr.mxu0 0.0
    %224 = vmatpush2.msra.mxu0 0.0
    %225 = vmatprep.subr.mxu0 0.0
    %226 = vmatpush2.msra.mxu0 0.0
    %227 = vmatprep.subr.mxu0 0.0
    %228 = vmatpush2.msra.mxu0 0.0
    %229 = vmatprep.subr.mxu0 0.0
    %230 = vmatpush2.msra.mxu0 0.0
    %231 = vmatprep.subr.mxu0 0.0
    %232 = vmatpush2.msra.mxu0 0.0
    %233 = vmatprep.subr.mxu0 0.0
    %234 = vmatpush2.msra.mxu0 0.0
    %235 = vmatprep.subr.mxu0 0.0
    %236 = vmatpush2.msra.mxu0 0.0
    %237 = vmatprep.subr.mxu0 0.0
    %238 = vmatpush2.msra.mxu0 0.0
    %239 = vmatprep.subr.mxu0 0.0
    %240 = vmatpush2.msra.mxu0 0.0
    %241 = vmatprep.subr.mxu0 0.0
    %242 = vmatpush2.msra.mxu0 0.0
    %243 = vmatprep.subr.mxu0 0.0
    %244 = vmatpush2.msra.mxu0 0.0
    %245 = vmatprep.subr.mxu0 0.0
    %246 = vmatpush2.msra.mxu0 0.0
    %247 = vmatprep.subr.mxu0 0.0
    %248 = vmatpush2.msra.mxu0 0.0
    %249 = vmatprep.mubr.f32.mxu0 0.0
    %250 = vmatmul.mubr.f32.gmra.mxu0 %v37
    %v251 = vpop.f32.mrf.mxu0
    %v252 = vadd.f32 0.0, %v251
    %v253 = vpop.f32.mrf.mxu0
    %v254 = vadd.f32 0.0, %v253
    %255 = vmatprep.mubr.f32.mxu0 0.0
    %256 = vmatmul.mubr.f32.gmra.mxu0 %v38
    %v257 = vpop.f32.mrf.mxu0
    %v258 = vadd.f32 0.0, %v257
    %v259 = vpop.f32.mrf.mxu0
    %v260 = vadd.f32 0.0, %v259
    %261 = vdwg.mxu0
    %262 = vst [vmem:[#allocation2 + $0x20] sm:$0xff] %v252
    %263 = vst.msk [vmem:[#allocation2 + $0x28] sm:$0xff] %vm36, %v254
    %264 = vst [vmem:[#allocation2 + $0x30] sm:$0xff] %v258
    %265 = vst.msk [vmem:[#allocation2 + $0x38] sm:$0xff] %vm36, %v260
    %v266 = vld [vmem:[%s0] sm:$0xff]
    %v267 = vld [vmem:[%s0 + $0x8] sm:$0xff]
    %v268 = vld [vmem:[#allocation2] sm:$0xff]
    %v269 = vld [vmem:[#allocation2 + $0x8] sm:$0xff]
    %v270 = vld [vmem:[#allocation2 + $0x10] sm:$0xff]
    %v271 = vld [vmem:[#allocation2 + $0x18] sm:$0xff]
    %v272 = vld [vmem:[#allocation2 + $0x20] sm:$0xff]
    %v273 = vld [vmem:[#allocation2 + $0x28] sm:$0xff]
    %v274 = vld [vmem:[#allocation2 + $0x30] sm:$0xff]
    %v275 = vld [vmem:[#allocation2 + $0x38] sm:$0xff]
    %v276 = vld [vmem:[%s5] sm:$0x3]
    %v278 = vlaneseq
    %v279 = vshrl.u32 %v278, 7
    %v280 = vsub.s32 0, %v279
    %v281 = vrot.slane %v276, %v280
    %v282 = vlaneseq
    %v283 = vshrl.u32 %v282, 7
    %v284 = vsub.s32 1, %v283
    %v285 = vrot.slane %v276, %v284
    %vm288 = vcmask 261120
    %v290 = vsel %vm288, %v266, 0
    %v293 = vsel %vm288, %v267, 0
    %295 = vmatprep.subr.mxu0 0.0
    %296 = vmatpush1.msra.mxu0 0.0
    %297 = vmatprep.subr.mxu0 0.0
    %298 = vmatpush1.msra.mxu0 0.0
    %299 = vmatprep.subr.mxu0 0.0
    %300 = vmatpush1.msra.mxu0 0.0
    %301 = vmatprep.subr.mxu0 0.0
    %302 = vmatpush1.msra.mxu0 0.0
    %303 = vmatprep.subr.mxu0 0.0
    %304 = vmatpush1.msra.mxu0 0.0
    %305 = vmatprep.subr.mxu0 0.0
    %306 = vmatpush1.msra.mxu0 0.0
    %307 = vmatprep.subr.mxu0 0.0
    %308 = vmatpush1.msra.mxu0 0.0
    %309 = vmatprep.subr.mxu0 0.0
    %310 = vmatpush1.msra.mxu0 0.0
    %311 = vmatprep.subr.mxu0 0.0
    %312 = vmatpush1.msra.mxu0 0.0
    %313 = vmatprep.subr.mxu0 0.0
    %314 = vmatpush1.msra.mxu0 0.0
    %315 = vmatprep.subr.mxu0 0.0
    %316 = vmatpush1.msra.mxu0 0.0
    %317 = vmatprep.subr.mxu0 0.0
    %318 = vmatpush1.msra.mxu0 0.0
    %319 = vmatprep.subr.mxu0 %v275
    %320 = vmatpush1.msra.mxu0 %v274
    %321 = vmatprep.subr.mxu0 %v273
    %322 = vmatpush1.msra.mxu0 %v272
    %323 = vmatprep.subr.mxu0 %v271
    %324 = vmatpush1.msra.mxu0 %v270
    %325 = vmatprep.subr.mxu0 %v269
    %326 = vmatpush1.msra.mxu0 %v268
    %327 = vmatprep.subr.mxu0 0.0
    %328 = vmatpush2.msra.mxu0 0.0
    %329 = vmatprep.subr.mxu0 0.0
    %330 = vmatpush2.msra.mxu0 0.0
    %331 = vmatprep.subr.mxu0 0.0
    %332 = vmatpush2.msra.mxu0 0.0
    %333 = vmatprep.subr.mxu0 0.0
    %334 = vmatpush2.msra.mxu0 0.0
    %335 = vmatprep.subr.mxu0 0.0
    %336 = vmatpush2.msra.mxu0 0.0
    %337 = vmatprep.subr.mxu0 0.0
    %338 = vmatpush2.msra.mxu0 0.0
    %339 = vmatprep.subr.mxu0 0.0
    %340 = vmatpush2.msra.mxu0 0.0
    %341 = vmatprep.subr.mxu0 0.0
    %342 = vmatpush2.msra.mxu0 0.0
    %343 = vmatprep.subr.mxu0 0.0
    %344 = vmatpush2.msra.mxu0 0.0
    %345 = vmatprep.subr.mxu0 0.0
    %346 = vmatpush2.msra.mxu0 0.0
    %347 = vmatprep.subr.mxu0 0.0
    %348 = vmatpush2.msra.mxu0 0.0
    %349 = vmatprep.subr.mxu0 0.0
    %350 = vmatpush2.msra.mxu0 0.0
    %351 = vmatprep.subr.mxu0 0.0
    %352 = vmatpush2.msra.mxu0 0.0
    %353 = vmatprep.subr.mxu0 0.0
    %354 = vmatpush2.msra.mxu0 0.0
    %355 = vmatprep.subr.mxu0 0.0
    %356 = vmatpush2.msra.mxu0 0.0
    %357 = vmatprep.subr.mxu0 0.0
    %358 = vmatpush2.msra.mxu0 0.0
    %359 = vmatprep.mubr.f32.mxu0 0.0
    %360 = vmatmul.mubr.f32.gmra.mxu0 %v290
    %v361 = vpop.f32.mrf.mxu0
    %v362 = vadd.f32 %v281, %v361
    %v363 = vpop.f32.mrf.mxu0
    %v364 = vadd.f32 %v285, %v363
    %365 = vmatprep.mubr.f32.mxu0 0.0
    %366 = vmatmul.mubr.f32.gmra.mxu0 %v293
    %v367 = vpop.f32.mrf.mxu0
    %v368 = vadd.f32 %v281, %v367
    %v369 = vpop.f32.mrf.mxu0
    %v370 = vadd.f32 %v285, %v369
    %371 = vdwg.mxu0
    %v372 = vxor.u32 %v362, 2147483648
    %v373 = vxor.u32 %v368, 2147483648
    %v374 = vmul.f32 %v372, 1.442695
    %v375 = vpow.pop %v374
    %v376 = vmul.f32 %v373, 1.442695
    %v377 = vpow.pop %v376
    %v378 = vadd.f32 %v375, 1.0
    %v379 = vadd.f32 %v377, 1.0
    %v380 = vrcp.pop %v378
    %v381 = vmul.f32 1.0, %v380
    %v382 = vrcp.pop %v379
    %v383 = vmul.f32 1.0, %v382
    %v384 = vmul.f32 %v381, %v26
    %v385 = vmul.f32 %v383, %v27
    %v386 = vld [vmem:[%s4] sm:$0xff]
    %v387 = vld [vmem:[%s4 + $0x8] sm:$0xff]
    %v388 = vld [vmem:[%s4 + $0x10] sm:$0xff]
    %v389 = vld [vmem:[%s4 + $0x18] sm:$0xff]
    %v390 = vld [vmem:[%s4 + $0x20] sm:$0xff]
    %v391 = vld [vmem:[%s4 + $0x28] sm:$0xff]
    %v392 = vld [vmem:[%s4 + $0x30] sm:$0xff]
    %v393 = vld [vmem:[%s4 + $0x38] sm:$0xff]
    %v395 = vsel %vm36, %v384, 0
    %v398 = vsel %vm36, %v385, 0
    %400 = vmatprep.subr.mxu0 0.0
    %401 = vmatpush1.msra.mxu0 0.0
    %402 = vmatprep.subr.mxu0 0.0
    %403 = vmatpush1.msra.mxu0 0.0
    %404 = vmatprep.subr.mxu0 0.0
    %405 = vmatpush1.msra.mxu0 0.0
    %406 = vmatprep.subr.mxu0 0.0
    %407 = vmatpush1.msra.mxu0 0.0
    %408 = vmatprep.subr.mxu0 0.0
    %409 = vmatpush1.msra.mxu0 0.0
    %410 = vmatprep.subr.mxu0 0.0
    %411 = vmatpush1.msra.mxu0 0.0
    %412 = vmatprep.subr.mxu0 0.0
    %413 = vmatpush1.msra.mxu0 0.0
    %414 = vmatprep.subr.mxu0 0.0
    %415 = vmatpush1.msra.mxu0 0.0
    %416 = vmatprep.subr.mxu0 0.0
    %417 = vmatpush1.msra.mxu0 %v393
    %418 = vmatprep.subr.mxu0 0.0
    %419 = vmatpush1.msra.mxu0 %v392
    %420 = vmatprep.subr.mxu0 0.0
    %421 = vmatpush1.msra.mxu0 %v391
    %422 = vmatprep.subr.mxu0 0.0
    %423 = vmatpush1.msra.mxu0 %v390
    %424 = vmatprep.subr.mxu0 0.0
    %425 = vmatpush1.msra.mxu0 %v389
    %426 = vmatprep.subr.mxu0 0.0
    %427 = vmatpush1.msra.mxu0 %v388
    %428 = vmatprep.subr.mxu0 0.0
    %429 = vmatpush1.msra.mxu0 %v387
    %430 = vmatprep.subr.mxu0 0.0
    %431 = vmatpush1.msra.mxu0 %v386
    %432 = vmatprep.subr.mxu0 0.0
    %433 = vmatpush2.msra.mxu0 0.0
    %434 = vmatprep.subr.mxu0 0.0
    %435 = vmatpush2.msra.mxu0 0.0
    %436 = vmatprep.subr.mxu0 0.0
    %437 = vmatpush2.msra.mxu0 0.0
    %438 = vmatprep.subr.mxu0 0.0
    %439 = vmatpush2.msra.mxu0 0.0
    %440 = vmatprep.subr.mxu0 0.0
    %441 = vmatpush2.msra.mxu0 0.0
    %442 = vmatprep.subr.mxu0 0.0
    %443 = vmatpush2.msra.mxu0 0.0
    %444 = vmatprep.subr.mxu0 0.0
    %445 = vmatpush2.msra.mxu0 0.0
    %446 = vmatprep.subr.mxu0 0.0
    %447 = vmatpush2.msra.mxu0 0.0
    %448 = vmatprep.subr.mxu0 0.0
    %449 = vmatpush2.msra.mxu0 0.0
    %450 = vmatprep.subr.mxu0 0.0
    %451 = vmatpush2.msra.mxu0 0.0
    %452 = vmatprep.subr.mxu0 0.0
    %453 = vmatpush2.msra.mxu0 0.0
    %454 = vmatprep.subr.mxu0 0.0
    %455 = vmatpush2.msra.mxu0 0.0
    %456 = vmatprep.subr.mxu0 0.0
    %457 = vmatpush2.msra.mxu0 0.0
    %458 = vmatprep.subr.mxu0 0.0
    %459 = vmatpush2.msra.mxu0 0.0
    %460 = vmatprep.subr.mxu0 0.0
    %461 = vmatpush2.msra.mxu0 0.0
    %462 = vmatprep.subr.mxu0 0.0
    %463 = vmatpush2.msra.mxu0 0.0
    %464 = vmatprep.mubr.f32.mxu0 0.0
    %465 = vmatmul.mubr.f32.gmra.mxu0 %v395
    %v466 = vpop.f32.mrf.mxu0
    %v467 = vadd.f32 0.0, %v466
    %v468 = vpop.f32.mrf.mxu0
    %469 = vmatprep.mubr.f32.mxu0 0.0
    %470 = vmatmul.mubr.f32.gmra.mxu0 %v398
    %v471 = vpop.f32.mrf.mxu0
    %v472 = vadd.f32 0.0, %v471
    %v473 = vpop.f32.mrf.mxu0
    %474 = vdwg.mxu0
    %475 = vst.msk [vmem:[#allocation2] sm:$0xff] %vm36, %v467
    %476 = vst.msk [vmem:[#allocation2 + $0x10] sm:$0xff] %vm36, %v472
    %s477 = scalar_lea.vmem %s4, 64
    %v478 = vld [vmem:[%s477] sm:$0xff]
    %v479 = vld [vmem:[%s477 + $0x8] sm:$0xff]
    %v480 = vld [vmem:[%s477 + $0x10] sm:$0xff]
    %v481 = vld [vmem:[%s477 + $0x18] sm:$0xff]
    %v482 = vld [vmem:[%s477 + $0x20] sm:$0xff]
    %v483 = vld [vmem:[%s477 + $0x28] sm:$0xff]
    %v484 = vld [vmem:[%s477 + $0x30] sm:$0xff]
    %v485 = vld [vmem:[%s477 + $0x38] sm:$0xff]
    %486 = vmatprep.subr.mxu0 0.0
    %487 = vmatpush1.msra.mxu0 0.0
    %488 = vmatprep.subr.mxu0 0.0
    %489 = vmatpush1.msra.mxu0 0.0
    %490 = vmatprep.subr.mxu0 0.0
    %491 = vmatpush1.msra.mxu0 0.0
    %492 = vmatprep.subr.mxu0 0.0
    %493 = vmatpush1.msra.mxu0 0.0
    %494 = vmatprep.subr.mxu0 0.0
    %495 = vmatpush1.msra.mxu0 0.0
    %496 = vmatprep.subr.mxu0 0.0
    %497 = vmatpush1.msra.mxu0 0.0
    %498 = vmatprep.subr.mxu0 0.0
    %499 = vmatpush1.msra.mxu0 0.0
    %500 = vmatprep.subr.mxu0 0.0
    %501 = vmatpush1.msra.mxu0 0.0
    %502 = vmatprep.subr.mxu0 0.0
    %503 = vmatpush1.msra.mxu0 %v485
    %504 = vmatprep.subr.mxu0 0.0
    %505 = vmatpush1.msra.mxu0 %v484
    %506 = vmatprep.subr.mxu0 0.0
    %507 = vmatpush1.msra.mxu0 %v483
    %508 = vmatprep.subr.mxu0 0.0
    %509 = vmatpush1.msra.mxu0 %v482
    %510 = vmatprep.subr.mxu0 0.0
    %511 = vmatpush1.msra.mxu0 %v481
    %512 = vmatprep.subr.mxu0 0.0
    %513 = vmatpush1.msra.mxu0 %v480
    %514 = vmatprep.subr.mxu0 0.0
    %515 = vmatpush1.msra.mxu0 %v479
    %516 = vmatprep.subr.mxu0 0.0
    %517 = vmatpush1.msra.mxu0 %v478
    %518 = vmatprep.subr.mxu0 0.0
    %519 = vmatpush2.msra.mxu0 0.0
    %520 = vmatprep.subr.mxu0 0.0
    %521 = vmatpush2.msra.mxu0 0.0
    %522 = vmatprep.subr.mxu0 0.0
    %523 = vmatpush2.msra.mxu0 0.0
    %524 = vmatprep.subr.mxu0 0.0
    %525 = vmatpush2.msra.mxu0 0.0
    %526 = vmatprep.subr.mxu0 0.0
    %527 = vmatpush2.msra.mxu0 0.0
    %528 = vmatprep.subr.mxu0 0.0
    %529 = vmatpush2.msra.mxu0 0.0
    %530 = vmatprep.subr.mxu0 0.0
    %531 = vmatpush2.msra.mxu0 0.0
    %532 = vmatprep.subr.mxu0 0.0
    %533 = vmatpush2.msra.mxu0 0.0
    %534 = vmatprep.subr.mxu0 0.0
    %535 = vmatpush2.msra.mxu0 0.0
    %536 = vmatprep.subr.mxu0 0.0
    %537 = vmatpush2.msra.mxu0 0.0
    %538 = vmatprep.subr.mxu0 0.0
    %539 = vmatpush2.msra.mxu0 0.0
    %540 = vmatprep.subr.mxu0 0.0
    %541 = vmatpush2.msra.mxu0 0.0
    %542 = vmatprep.subr.mxu0 0.0
    %543 = vmatpush2.msra.mxu0 0.0
    %544 = vmatprep.subr.mxu0 0.0
    %545 = vmatpush2.msra.mxu0 0.0
    %546 = vmatprep.subr.mxu0 0.0
    %547 = vmatpush2.msra.mxu0 0.0
    %548 = vmatprep.subr.mxu0 0.0
    %549 = vmatpush2.msra.mxu0 0.0
    %550 = vmatprep.mubr.f32.mxu0 0.0
    %551 = vmatmul.mubr.f32.gmra.mxu0 %v395
    %v552 = vpop.f32.mrf.mxu0
    %v553 = vadd.f32 0.0, %v552
    %v554 = vpop.f32.mrf.mxu0
    %555 = vmatprep.mubr.f32.mxu0 0.0
    %556 = vmatmul.mubr.f32.gmra.mxu0 %v398
    %v557 = vpop.f32.mrf.mxu0
    %v558 = vadd.f32 0.0, %v557
    %v559 = vpop.f32.mrf.mxu0
    %560 = vdwg.mxu0
    %561 = vst.msk [vmem:[#allocation2 + $0x20] sm:$0xff] %vm36, %v553
    %562 = vst.msk [vmem:[#allocation2 + $0x30] sm:$0xff] %vm36, %v558
    %v563 = vld [vmem:[%s0] sm:$0xff]
    %v564 = vld [vmem:[%s0 + $0x8] sm:$0xff]
    %v565 = vld [vmem:[#allocation2] sm:$0xff]
    %v566 = vld [vmem:[#allocation2 + $0x10] sm:$0xff]
    %v567 = vld [vmem:[#allocation2 + $0x20] sm:$0xff]
    %v568 = vld [vmem:[#allocation2 + $0x30] sm:$0xff]
    %v570 = vsel %vm288, %v563, 0
    %v573 = vsel %vm288, %v564, 0
    %575 = vmatprep.subr.mxu0 0.0
    %576 = vmatpush1.msra.mxu0 0.0
    %577 = vmatprep.subr.mxu0 0.0
    %578 = vmatpush1.msra.mxu0 0.0
    %579 = vmatprep.subr.mxu0 0.0
    %580 = vmatpush1.msra.mxu0 0.0
    %581 = vmatprep.subr.mxu0 0.0
    %582 = vmatpush1.msra.mxu0 0.0
    %583 = vmatprep.subr.mxu0 0.0
    %584 = vmatpush1.msra.mxu0 0.0
    %585 = vmatprep.subr.mxu0 0.0
    %586 = vmatpush1.msra.mxu0 0.0
    %587 = vmatprep.subr.mxu0 0.0
    %588 = vmatpush1.msra.mxu0 0.0
    %589 = vmatprep.subr.mxu0 0.0
    %590 = vmatpush1.msra.mxu0 0.0
    %591 = vmatprep.subr.mxu0 0.0
    %592 = vmatpush1.msra.mxu0 0.0
    %593 = vmatprep.subr.mxu0 0.0
    %594 = vmatpush1.msra.mxu0 0.0
    %595 = vmatprep.subr.mxu0 0.0
    %596 = vmatpush1.msra.mxu0 0.0
    %597 = vmatprep.subr.mxu0 0.0
    %598 = vmatpush1.msra.mxu0 0.0
    %599 = vmatprep.subr.mxu0 0.0
    %600 = vmatpush1.msra.mxu0 %v568
    %601 = vmatprep.subr.mxu0 0.0
    %602 = vmatpush1.msra.mxu0 %v567
    %603 = vmatprep.subr.mxu0 0.0
    %604 = vmatpush1.msra.mxu0 %v566
    %605 = vmatprep.subr.mxu0 0.0
    %606 = vmatpush1.msra.mxu0 %v565
    %607 = vmatprep.subr.mxu0 0.0
    %608 = vmatpush2.msra.mxu0 0.0
    %609 = vmatprep.subr.mxu0 0.0
    %610 = vmatpush2.msra.mxu0 0.0
    %611 = vmatprep.subr.mxu0 0.0
    %612 = vmatpush2.msra.mxu0 0.0
    %613 = vmatprep.subr.mxu0 0.0
    %614 = vmatpush2.msra.mxu0 0.0
    %615 = vmatprep.subr.mxu0 0.0
    %616 = vmatpush2.msra.mxu0 0.0
    %617 = vmatprep.subr.mxu0 0.0
    %618 = vmatpush2.msra.mxu0 0.0
    %619 = vmatprep.subr.mxu0 0.0
    %620 = vmatpush2.msra.mxu0 0.0
    %621 = vmatprep.subr.mxu0 0.0
    %622 = vmatpush2.msra.mxu0 0.0
    %623 = vmatprep.subr.mxu0 0.0
    %624 = vmatpush2.msra.mxu0 0.0
    %625 = vmatprep.subr.mxu0 0.0
    %626 = vmatpush2.msra.mxu0 0.0
    %627 = vmatprep.subr.mxu0 0.0
    %628 = vmatpush2.msra.mxu0 0.0
    %629 = vmatprep.subr.mxu0 0.0
    %630 = vmatpush2.msra.mxu0 0.0
    %631 = vmatprep.subr.mxu0 0.0
    %632 = vmatpush2.msra.mxu0 0.0
    %633 = vmatprep.subr.mxu0 0.0
    %634 = vmatpush2.msra.mxu0 0.0
    %635 = vmatprep.subr.mxu0 0.0
    %636 = vmatpush2.msra.mxu0 0.0
    %637 = vmatprep.subr.mxu0 0.0
    %638 = vmatpush2.msra.mxu0 0.0
    %639 = vmatprep.mubr.f32.mxu0 0.0
    %640 = vmatmul.mubr.f32.gmra.mxu0 %v570
    %v641 = vpop.f32.mrf.mxu0
    %v642 = vadd.f32 %v364, %v641
    %v643 = vpop.f32.mrf.mxu0
    %644 = vmatprep.mubr.f32.mxu0 0.0
    %645 = vmatmul.mubr.f32.gmra.mxu0 %v573
    %v646 = vpop.f32.mrf.mxu0
    %v647 = vadd.f32 %v370, %v646
    %v648 = vpop.f32.mrf.mxu0
    %649 = vdwg.mxu0
    %v650 = vtanh.pop %v642
    %v651 = vtanh.pop %v647
    %v652 = vmul.f32 %v381, %v31
    %v653 = vmul.f32 %v383, %v33
    %v654 = vsub.f32 1.0, %v381
    %v655 = vsub.f32 1.0, %v383
    %658 = vrot.lane.b32.xlu0 %v650, 64
    %v659 = vpop.permute.xlu0 %658
    %660 = vrot.lane.b32.xlu0 %v651, 64
    %v661 = vpop.permute.xlu0 %660
    %v664 = vmul.f32 %v654, %v659
    %v665 = vmul.f32 %v655, %v661
    %v666 = vadd.f32 %v652, %v664
    %v667 = vadd.f32 %v653, %v665
    %670 = vrot.lane.b32.xlu0 %v666, 64
    %v671 = vpop.permute.xlu0 %670
    %672 = vrot.lane.b32.xlu0 %v667, 64
    %v673 = vpop.permute.xlu0 %672
    %676 = vst.msk [vmem:[#allocation3] sm:$0xff] %vm36, %v671
    %677 = vst.msk [vmem:[#allocation3 + $0x8] sm:$0xff] %vm36, %v673
    %s678 = scalar_lea.vmem %s2, 16
    %v679 = vld [vmem:[%s678] sm:$0xff]
    %v680 = vld [vmem:[%s678 + $0x8] sm:$0xff]
    %683 = vrot.lane.b32.xlu0 %v679, 64
    %v684 = vpop.permute.xlu0 %683
    %685 = vrot.lane.b32.xlu0 %v680, 64
    %v686 = vpop.permute.xlu0 %685
    %v689 = vsel %vm36, %v671, %v684
    %v690 = vsel %vm36, %v673, %v686
    %s691 = scalar_lea.vmem %s3, 512
    %v692 = vld [vmem:[%s691] sm:$0xff]
    %v693 = vld [vmem:[%s691 + $0x8] sm:$0xff]
    %v694 = vld [vmem:[%s691 + $0x10] sm:$0xff]
    %v695 = vld [vmem:[%s691 + $0x18] sm:$0xff]
    %v696 = vld [vmem:[%s691 + $0x20] sm:$0xff]
    %v697 = vld [vmem:[%s691 + $0x28] sm:$0xff]
    %v698 = vld [vmem:[%s691 + $0x30] sm:$0xff]
    %v699 = vld [vmem:[%s691 + $0x38] sm:$0xff]
    %v700 = vld [vmem:[%s691 + $0x40] sm:$0xff]
    %v701 = vld [vmem:[%s691 + $0x48] sm:$0xff]
    %v702 = vld [vmem:[%s691 + $0x50] sm:$0xff]
    %v703 = vld [vmem:[%s691 + $0x58] sm:$0xff]
    %v704 = vld [vmem:[%s691 + $0x60] sm:$0xff]
    %v705 = vld [vmem:[%s691 + $0x68] sm:$0xff]
    %v706 = vld [vmem:[%s691 + $0x70] sm:$0xff]
    %v707 = vld [vmem:[%s691 + $0x78] sm:$0xff]
    %v708 = vld [vmem:[%s691 + $0x80] sm:$0xff]
    %v709 = vld [vmem:[%s691 + $0x88] sm:$0xff]
    %v710 = vld [vmem:[%s691 + $0x90] sm:$0xff]
    %v711 = vld [vmem:[%s691 + $0x98] sm:$0xff]
    %v712 = vld [vmem:[%s691 + $0xa0] sm:$0xff]
    %v713 = vld [vmem:[%s691 + $0xa8] sm:$0xff]
    %v714 = vld [vmem:[%s691 + $0xb0] sm:$0xff]
    %v715 = vld [vmem:[%s691 + $0xb8] sm:$0xff]
    %v716 = vld [vmem:[%s691 + $0xc0] sm:$0xff]
    %v717 = vld [vmem:[%s691 + $0xc8] sm:$0xff]
    %v718 = vld [vmem:[%s691 + $0xd0] sm:$0xff]
    %v719 = vld [vmem:[%s691 + $0xd8] sm:$0xff]
    %v720 = vld [vmem:[%s691 + $0xe0] sm:$0xff]
    %v721 = vld [vmem:[%s691 + $0xe8] sm:$0xff]
    %v722 = vld [vmem:[%s691 + $0xf0] sm:$0xff]
    %v723 = vld [vmem:[%s691 + $0xf8] sm:$0xff]
    %724 = vmatprep.subr.mxu0 %v723
    %725 = vmatpush1.msra.mxu0 %v722
    %726 = vmatprep.subr.mxu0 %v721
    %727 = vmatpush1.msra.mxu0 %v720
    %728 = vmatprep.subr.mxu0 %v719
    %729 = vmatpush1.msra.mxu0 %v718
    %730 = vmatprep.subr.mxu0 %v717
    %731 = vmatpush1.msra.mxu0 %v716
    %732 = vmatprep.subr.mxu0 %v715
    %733 = vmatpush1.msra.mxu0 %v714
    %734 = vmatprep.subr.mxu0 %v713
    %735 = vmatpush1.msra.mxu0 %v712
    %736 = vmatprep.subr.mxu0 %v711
    %737 = vmatpush1.msra.mxu0 %v710
    %738 = vmatprep.subr.mxu0 %v709
    %739 = vmatpush1.msra.mxu0 %v708
    %740 = vmatprep.subr.mxu0 %v707
    %741 = vmatpush1.msra.mxu0 %v706
    %742 = vmatprep.subr.mxu0 %v705
    %743 = vmatpush1.msra.mxu0 %v704
    %744 = vmatprep.subr.mxu0 %v703
    %745 = vmatpush1.msra.mxu0 %v702
    %746 = vmatprep.subr.mxu0 %v701
    %747 = vmatpush1.msra.mxu0 %v700
    %748 = vmatprep.subr.mxu0 %v699
    %749 = vmatpush1.msra.mxu0 %v698
    %750 = vmatprep.subr.mxu0 %v697
    %751 = vmatpush1.msra.mxu0 %v696
    %752 = vmatprep.subr.mxu0 %v695
    %753 = vmatpush1.msra.mxu0 %v694
    %754 = vmatprep.subr.mxu0 %v693
    %755 = vmatpush1.msra.mxu0 %v692
    %756 = vmatprep.subr.mxu0 0.0
    %757 = vmatpush2.msra.mxu0 0.0
    %758 = vmatprep.subr.mxu0 0.0
    %759 = vmatpush2.msra.mxu0 0.0
    %760 = vmatprep.subr.mxu0 0.0
    %761 = vmatpush2.msra.mxu0 0.0
    %762 = vmatprep.subr.mxu0 0.0
    %763 = vmatpush2.msra.mxu0 0.0
    %764 = vmatprep.subr.mxu0 0.0
    %765 = vmatpush2.msra.mxu0 0.0
    %766 = vmatprep.subr.mxu0 0.0
    %767 = vmatpush2.msra.mxu0 0.0
    %768 = vmatprep.subr.mxu0 0.0
    %769 = vmatpush2.msra.mxu0 0.0
    %770 = vmatprep.subr.mxu0 0.0
    %771 = vmatpush2.msra.mxu0 0.0
    %772 = vmatprep.subr.mxu0 0.0
    %773 = vmatpush2.msra.mxu0 0.0
    %774 = vmatprep.subr.mxu0 0.0
    %775 = vmatpush2.msra.mxu0 0.0
    %776 = vmatprep.subr.mxu0 0.0
    %777 = vmatpush2.msra.mxu0 0.0
    %778 = vmatprep.subr.mxu0 0.0
    %779 = vmatpush2.msra.mxu0 0.0
    %780 = vmatprep.subr.mxu0 0.0
    %781 = vmatpush2.msra.mxu0 0.0
    %782 = vmatprep.subr.mxu0 0.0
    %783 = vmatpush2.msra.mxu0 0.0
    %784 = vmatprep.subr.mxu0 0.0
    %785 = vmatpush2.msra.mxu0 0.0
    %786 = vmatprep.subr.mxu0 0.0
    %787 = vmatpush2.msra.mxu0 0.0
    %788 = vmatprep.mubr.f32.mxu0 0.0
    %789 = vmatmul.mubr.f32.gmra.mxu0 %v689
    %v790 = vpop.f32.mrf.mxu0
    %v791 = vadd.f32 0.0, %v790
    %v792 = vpop.f32.mrf.mxu0
    %v793 = vadd.f32 0.0, %v792
    %794 = vmatprep.mubr.f32.mxu0 0.0
    %795 = vmatmul.mubr.f32.gmra.mxu0 %v690
    %v796 = vpop.f32.mrf.mxu0
    %v797 = vadd.f32 0.0, %v796
    %v798 = vpop.f32.mrf.mxu0
    %v799 = vadd.f32 0.0, %v798
    %800 = vdwg.mxu0
    %801 = vst [vmem:[#allocation2] sm:$0xff] %v791
    %802 = vst.msk [vmem:[#allocation2 + $0x8] sm:$0xff] %vm36, %v793
    %803 = vst [vmem:[#allocation2 + $0x10] sm:$0xff] %v797
    %804 = vst.msk [vmem:[#allocation2 + $0x18] sm:$0xff] %vm36, %v799
    %s805 = scalar_lea.vmem %s3, 768
    %v806 = vld [vmem:[%s805] sm:$0xff]
    %v807 = vld [vmem:[%s805 + $0x8] sm:$0xff]
    %v808 = vld [vmem:[%s805 + $0x10] sm:$0xff]
    %v809 = vld [vmem:[%s805 + $0x18] sm:$0xff]
    %v810 = vld [vmem:[%s805 + $0x20] sm:$0xff]
    %v811 = vld [vmem:[%s805 + $0x28] sm:$0xff]
    %v812 = vld [vmem:[%s805 + $0x30] sm:$0xff]
    %v813 = vld [vmem:[%s805 + $0x38] sm:$0xff]
    %v814 = vld [vmem:[%s805 + $0x40] sm:$0xff]
    %v815 = vld [vmem:[%s805 + $0x48] sm:$0xff]
    %v816 = vld [vmem:[%s805 + $0x50] sm:$0xff]
    %v817 = vld [vmem:[%s805 + $0x58] sm:$0xff]
    %v818 = vld [vmem:[%s805 + $0x60] sm:$0xff]
    %v819 = vld [vmem:[%s805 + $0x68] sm:$0xff]
    %v820 = vld [vmem:[%s805 + $0x70] sm:$0xff]
    %v821 = vld [vmem:[%s805 + $0x78] sm:$0xff]
    %v822 = vld [vmem:[%s805 + $0x80] sm:$0xff]
    %v823 = vld [vmem:[%s805 + $0x88] sm:$0xff]
    %v824 = vld [vmem:[%s805 + $0x90] sm:$0xff]
    %v825 = vld [vmem:[%s805 + $0x98] sm:$0xff]
    %v826 = vld [vmem:[%s805 + $0xa0] sm:$0xff]
    %v827 = vld [vmem:[%s805 + $0xa8] sm:$0xff]
    %v828 = vld [vmem:[%s805 + $0xb0] sm:$0xff]
    %v829 = vld [vmem:[%s805 + $0xb8] sm:$0xff]
    %v830 = vld [vmem:[%s805 + $0xc0] sm:$0xff]
    %v831 = vld [vmem:[%s805 + $0xc8] sm:$0xff]
    %v832 = vld [vmem:[%s805 + $0xd0] sm:$0xff]
    %v833 = vld [vmem:[%s805 + $0xd8] sm:$0xff]
    %v834 = vld [vmem:[%s805 + $0xe0] sm:$0xff]
    %v835 = vld [vmem:[%s805 + $0xe8] sm:$0xff]
    %v836 = vld [vmem:[%s805 + $0xf0] sm:$0xff]
    %v837 = vld [vmem:[%s805 + $0xf8] sm:$0xff]
    %838 = vmatprep.subr.mxu0 %v837
    %839 = vmatpush1.msra.mxu0 %v836
    %840 = vmatprep.subr.mxu0 %v835
    %841 = vmatpush1.msra.mxu0 %v834
    %842 = vmatprep.subr.mxu0 %v833
    %843 = vmatpush1.msra.mxu0 %v832
    %844 = vmatprep.subr.mxu0 %v831
    %845 = vmatpush1.msra.mxu0 %v830
    %846 = vmatprep.subr.mxu0 %v829
    %847 = vmatpush1.msra.mxu0 %v828
    %848 = vmatprep.subr.mxu0 %v827
    %849 = vmatpush1.msra.mxu0 %v826
    %850 = vmatprep.subr.mxu0 %v825
    %851 = vmatpush1.msra.mxu0 %v824
    %852 = vmatprep.subr.mxu0 %v823
    %853 = vmatpush1.msra.mxu0 %v822
    %854 = vmatprep.subr.mxu0 %v821
    %855 = vmatpush1.msra.mxu0 %v820
    %856 = vmatprep.subr.mxu0 %v819
    %857 = vmatpush1.msra.mxu0 %v818
    %858 = vmatprep.subr.mxu0 %v817
    %859 = vmatpush1.msra.mxu0 %v816
    %860 = vmatprep.subr.mxu0 %v815
    %861 = vmatpush1.msra.mxu0 %v814
    %862 = vmatprep.subr.mxu0 %v813
    %863 = vmatpush1.msra.mxu0 %v812
    %864 = vmatprep.subr.mxu0 %v811
    %865 = vmatpush1.msra.mxu0 %v810
    %866 = vmatprep.subr.mxu0 %v809
    %867 = vmatpush1.msra.mxu0 %v808
    %868 = vmatprep.subr.mxu0 %v807
    %869 = vmatpush1.msra.mxu0 %v806
    %870 = vmatprep.subr.mxu0 0.0
    %871 = vmatpush2.msra.mxu0 0.0
    %872 = vmatprep.subr.mxu0 0.0
    %873 = vmatpush2.msra.mxu0 0.0
    %874 = vmatprep.subr.mxu0 0.0
    %875 = vmatpush2.msra.mxu0 0.0
    %876 = vmatprep.subr.mxu0 0.0
    %877 = vmatpush2.msra.mxu0 0.0
    %878 = vmatprep.subr.mxu0 0.0
    %879 = vmatpush2.msra.mxu0 0.0
    %880 = vmatprep.subr.mxu0 0.0
    %881 = vmatpush2.msra.mxu0 0.0
    %882 = vmatprep.subr.mxu0 0.0
    %883 = vmatpush2.msra.mxu0 0.0
    %884 = vmatprep.subr.mxu0 0.0
    %885 = vmatpush2.msra.mxu0 0.0
    %886 = vmatprep.subr.mxu0 0.0
    %887 = vmatpush2.msra.mxu0 0.0
    %888 = vmatprep.subr.mxu0 0.0
    %889 = vmatpush2.msra.mxu0 0.0
    %890 = vmatprep.subr.mxu0 0.0
    %891 = vmatpush2.msra.mxu0 0.0
    %892 = vmatprep.subr.mxu0 0.0
    %893 = vmatpush2.msra.mxu0 0.0
    %894 = vmatprep.subr.mxu0 0.0
    %895 = vmatpush2.msra.mxu0 0.0
    %896 = vmatprep.subr.mxu0 0.0
    %897 = vmatpush2.msra.mxu0 0.0
    %898 = vmatprep.subr.mxu0 0.0
    %899 = vmatpush2.msra.mxu0 0.0
    %900 = vmatprep.subr.mxu0 0.0
    %901 = vmatpush2.msra.mxu0 0.0
    %902 = vmatprep.mubr.f32.mxu0 0.0
    %903 = vmatmul.mubr.f32.gmra.mxu0 %v689
    %v904 = vpop.f32.mrf.mxu0
    %v905 = vadd.f32 0.0, %v904
    %v906 = vpop.f32.mrf.mxu0
    %v907 = vadd.f32 0.0, %v906
    %908 = vmatprep.mubr.f32.mxu0 0.0
    %909 = vmatmul.mubr.f32.gmra.mxu0 %v690
    %v910 = vpop.f32.mrf.mxu0
    %v911 = vadd.f32 0.0, %v910
    %v912 = vpop.f32.mrf.mxu0
    %v913 = vadd.f32 0.0, %v912
    %914 = vdwg.mxu0
    %915 = vst [vmem:[#allocation2 + $0x20] sm:$0xff] %v905
    %916 = vst.msk [vmem:[#allocation2 + $0x28] sm:$0xff] %vm36, %v907
    %917 = vst [vmem:[#allocation2 + $0x30] sm:$0xff] %v911
    %918 = vst.msk [vmem:[#allocation2 + $0x38] sm:$0xff] %vm36, %v913
    %v919 = vld [vmem:[%s0] sm:$0xff]
    %v920 = vld [vmem:[%s0 + $0x8] sm:$0xff]
    %v921 = vld [vmem:[#allocation2] sm:$0xff]
    %v922 = vld [vmem:[#allocation2 + $0x8] sm:$0xff]
    %v923 = vld [vmem:[#allocation2 + $0x10] sm:$0xff]
    %v924 = vld [vmem:[#allocation2 + $0x18] sm:$0xff]
    %v925 = vld [vmem:[#allocation2 + $0x20] sm:$0xff]
    %v926 = vld [vmem:[#allocation2 + $0x28] sm:$0xff]
    %v927 = vld [vmem:[#allocation2 + $0x30] sm:$0xff]
    %v928 = vld [vmem:[#allocation2 + $0x38] sm:$0xff]
    %s929 = scalar_lea.vmem %s5, 2
    %v930 = vld [vmem:[%s929] sm:$0x3]
    %v932 = vlaneseq
    %v933 = vshrl.u32 %v932, 7
    %v934 = vsub.s32 0, %v933
    %v935 = vrot.slane %v930, %v934
    %v936 = vlaneseq
    %v937 = vshrl.u32 %v936, 7
    %v938 = vsub.s32 1, %v937
    %v939 = vrot.slane %v930, %v938
    %v943 = vsel %vm288, %v919, 0
    %v946 = vsel %vm288, %v920, 0
    %948 = vmatprep.subr.mxu0 0.0
    %949 = vmatpush1.msra.mxu0 0.0
    %950 = vmatprep.subr.mxu0 0.0
    %951 = vmatpush1.msra.mxu0 0.0
    %952 = vmatprep.subr.mxu0 0.0
    %953 = vmatpush1.msra.mxu0 0.0
    %954 = vmatprep.subr.mxu0 0.0
    %955 = vmatpush1.msra.mxu0 0.0
    %956 = vmatprep.subr.mxu0 0.0
    %957 = vmatpush1.msra.mxu0 0.0
    %958 = vmatprep.subr.mxu0 0.0
    %959 = vmatpush1.msra.mxu0 0.0
    %960 = vmatprep.subr.mxu0 0.0
    %961 = vmatpush1.msra.mxu0 0.0
    %962 = vmatprep.subr.mxu0 0.0
    %963 = vmatpush1.msra.mxu0 0.0
    %964 = vmatprep.subr.mxu0 0.0
    %965 = vmatpush1.msra.mxu0 0.0
    %966 = vmatprep.subr.mxu0 0.0
    %967 = vmatpush1.msra.mxu0 0.0
    %968 = vmatprep.subr.mxu0 0.0
    %969 = vmatpush1.msra.mxu0 0.0
    %970 = vmatprep.subr.mxu0 0.0
    %971 = vmatpush1.msra.mxu0 0.0
    %972 = vmatprep.subr.mxu0 %v928
    %973 = vmatpush1.msra.mxu0 %v927
    %974 = vmatprep.subr.mxu0 %v926
    %975 = vmatpush1.msra.mxu0 %v925
    %976 = vmatprep.subr.mxu0 %v924
    %977 = vmatpush1.msra.mxu0 %v923
    %978 = vmatprep.subr.mxu0 %v922
    %979 = vmatpush1.msra.mxu0 %v921
    %980 = vmatprep.subr.mxu0 0.0
    %981 = vmatpush2.msra.mxu0 0.0
    %982 = vmatprep.subr.mxu0 0.0
    %983 = vmatpush2.msra.mxu0 0.0
    %984 = vmatprep.subr.mxu0 0.0
    %985 = vmatpush2.msra.mxu0 0.0
    %986 = vmatprep.subr.mxu0 0.0
    %987 = vmatpush2.msra.mxu0 0.0
    %988 = vmatprep.subr.mxu0 0.0
    %989 = vmatpush2.msra.mxu0 0.0
    %990 = vmatprep.subr.mxu0 0.0
    %991 = vmatpush2.msra.mxu0 0.0
    %992 = vmatprep.subr.mxu0 0.0
    %993 = vmatpush2.msra.mxu0 0.0
    %994 = vmatprep.subr.mxu0 0.0
    %995 = vmatpush2.msra.mxu0 0.0
    %996 = vmatprep.subr.mxu0 0.0
    %997 = vmatpush2.msra.mxu0 0.0
    %998 = vmatprep.subr.mxu0 0.0
    %999 = vmatpush2.msra.mxu0 0.0
    %1000 = vmatprep.subr.mxu0 0.0
    %1001 = vmatpush2.msra.mxu0 0.0
    %1002 = vmatprep.subr.mxu0 0.0
    %1003 = vmatpush2.msra.mxu0 0.0
    %1004 = vmatprep.subr.mxu0 0.0
    %1005 = vmatpush2.msra.mxu0 0.0
    %1006 = vmatprep.subr.mxu0 0.0
    %1007 = vmatpush2.msra.mxu0 0.0
    %1008 = vmatprep.subr.mxu0 0.0
    %1009 = vmatpush2.msra.mxu0 0.0
    %1010 = vmatprep.subr.mxu0 0.0
    %1011 = vmatpush2.msra.mxu0 0.0
    %1012 = vmatprep.mubr.f32.mxu0 0.0
    %1013 = vmatmul.mubr.f32.gmra.mxu0 %v943
    %v1014 = vpop.f32.mrf.mxu0
    %v1015 = vadd.f32 %v935, %v1014
    %v1016 = vpop.f32.mrf.mxu0
    %v1017 = vadd.f32 %v939, %v1016
    %1018 = vmatprep.mubr.f32.mxu0 0.0
    %1019 = vmatmul.mubr.f32.gmra.mxu0 %v946
    %v1020 = vpop.f32.mrf.mxu0
    %v1021 = vadd.f32 %v935, %v1020
    %v1022 = vpop.f32.mrf.mxu0
    %v1023 = vadd.f32 %v939, %v1022
    %1024 = vdwg.mxu0
    %v1025 = vxor.u32 %v1015, 2147483648
    %v1026 = vxor.u32 %v1021, 2147483648
    %v1027 = vmul.f32 %v1025, 1.442695
    %v1028 = vpow.pop %v1027
    %v1029 = vmul.f32 %v1026, 1.442695
    %v1030 = vpow.pop %v1029
    %v1031 = vadd.f32 %v1028, 1.0
    %v1032 = vadd.f32 %v1030, 1.0
    %v1033 = vrcp.pop %v1031
    %v1034 = vmul.f32 1.0, %v1033
    %v1035 = vrcp.pop %v1032
    %v1036 = vmul.f32 1.0, %v1035
    %v1037 = vmul.f32 %v1034, %v679
    %v1038 = vmul.f32 %v1036, %v680
    %s1039 = scalar_lea.vmem %s4, 128
    %v1040 = vld [vmem:[%s1039] sm:$0xff]
    %v1041 = vld [vmem:[%s1039 + $0x8] sm:$0xff]
    %v1042 = vld [vmem:[%s1039 + $0x10] sm:$0xff]
    %v1043 = vld [vmem:[%s1039 + $0x18] sm:$0xff]
    %v1044 = vld [vmem:[%s1039 + $0x20] sm:$0xff]
    %v1045 = vld [vmem:[%s1039 + $0x28] sm:$0xff]
    %v1046 = vld [vmem:[%s1039 + $0x30] sm:$0xff]
    %v1047 = vld [vmem:[%s1039 + $0x38] sm:$0xff]
    %v1049 = vsel %vm36, %v1037, 0
    %v1052 = vsel %vm36, %v1038, 0
    %1054 = vmatprep.subr.mxu0 0.0
    %1055 = vmatpush1.msra.mxu0 0.0
    %1056 = vmatprep.subr.mxu0 0.0
    %1057 = vmatpush1.msra.mxu0 0.0
    %1058 = vmatprep.subr.mxu0 0.0
    %1059 = vmatpush1.msra.mxu0 0.0
    %1060 = vmatprep.subr.mxu0 0.0
    %1061 = vmatpush1.msra.mxu0 0.0
    %1062 = vmatprep.subr.mxu0 0.0
    %1063 = vmatpush1.msra.mxu0 0.0
    %1064 = vmatprep.subr.mxu0 0.0
    %1065 = vmatpush1.msra.mxu0 0.0
    %1066 = vmatprep.subr.mxu0 0.0
    %1067 = vmatpush1.msra.mxu0 0.0
    %1068 = vmatprep.subr.mxu0 0.0
    %1069 = vmatpush1.msra.mxu0 0.0
    %1070 = vmatprep.subr.mxu0 0.0
    %1071 = vmatpush1.msra.mxu0 %v1047
    %1072 = vmatprep.subr.mxu0 0.0
    %1073 = vmatpush1.msra.mxu0 %v1046
    %1074 = vmatprep.subr.mxu0 0.0
    %1075 = vmatpush1.msra.mxu0 %v1045
    %1076 = vmatprep.subr.mxu0 0.0
    %1077 = vmatpush1.msra.mxu0 %v1044
    %1078 = vmatprep.subr.mxu0 0.0
    %1079 = vmatpush1.msra.mxu0 %v1043
    %1080 = vmatprep.subr.mxu0 0.0
    %1081 = vmatpush1.msra.mxu0 %v1042
    %1082 = vmatprep.subr.mxu0 0.0
    %1083 = vmatpush1.msra.mxu0 %v1041
    %1084 = vmatprep.subr.mxu0 0.0
    %1085 = vmatpush1.msra.mxu0 %v1040
    %1086 = vmatprep.subr.mxu0 0.0
    %1087 = vmatpush2.msra.mxu0 0.0
    %1088 = vmatprep.subr.mxu0 0.0
    %1089 = vmatpush2.msra.mxu0 0.0
    %1090 = vmatprep.subr.mxu0 0.0
    %1091 = vmatpush2.msra.mxu0 0.0
    %1092 = vmatprep.subr.mxu0 0.0
    %1093 = vmatpush2.msra.mxu0 0.0
    %1094 = vmatprep.subr.mxu0 0.0
    %1095 = vmatpush2.msra.mxu0 0.0
    %1096 = vmatprep.subr.mxu0 0.0
    %1097 = vmatpush2.msra.mxu0 0.0
    %1098 = vmatprep.subr.mxu0 0.0
    %1099 = vmatpush2.msra.mxu0 0.0
    %1100 = vmatprep.subr.mxu0 0.0
    %1101 = vmatpush2.msra.mxu0 0.0
    %1102 = vmatprep.subr.mxu0 0.0
    %1103 = vmatpush2.msra.mxu0 0.0
    %1104 = vmatprep.subr.mxu0 0.0
    %1105 = vmatpush2.msra.mxu0 0.0
    %1106 = vmatprep.subr.mxu0 0.0
    %1107 = vmatpush2.msra.mxu0 0.0
    %1108 = vmatprep.subr.mxu0 0.0
    %1109 = vmatpush2.msra.mxu0 0.0
    %1110 = vmatprep.subr.mxu0 0.0
    %1111 = vmatpush2.msra.mxu0 0.0
    %1112 = vmatprep.subr.mxu0 0.0
    %1113 = vmatpush2.msra.mxu0 0.0
    %1114 = vmatprep.subr.mxu0 0.0
    %1115 = vmatpush2.msra.mxu0 0.0
    %1116 = vmatprep.subr.mxu0 0.0
    %1117 = vmatpush2.msra.mxu0 0.0
    %1118 = vmatprep.mubr.f32.mxu0 0.0
    %1119 = vmatmul.mubr.f32.gmra.mxu0 %v1049
    %v1120 = vpop.f32.mrf.mxu0
    %v1121 = vadd.f32 0.0, %v1120
    %v1122 = vpop.f32.mrf.mxu0
    %1123 = vmatprep.mubr.f32.mxu0 0.0
    %1124 = vmatmul.mubr.f32.gmra.mxu0 %v1052
    %v1125 = vpop.f32.mrf.mxu0
    %v1126 = vadd.f32 0.0, %v1125
    %v1127 = vpop.f32.mrf.mxu0
    %1128 = vdwg.mxu0
    %1129 = vst.msk [vmem:[#allocation2] sm:$0xff] %vm36, %v1121
    %1130 = vst.msk [vmem:[#allocation2 + $0x10] sm:$0xff] %vm36, %v1126
    %s1131 = scalar_lea.vmem %s4, 192
    %v1132 = vld [vmem:[%s1131] sm:$0xff]
    %v1133 = vld [vmem:[%s1131 + $0x8] sm:$0xff]
    %v1134 = vld [vmem:[%s1131 + $0x10] sm:$0xff]
    %v1135 = vld [vmem:[%s1131 + $0x18] sm:$0xff]
    %v1136 = vld [vmem:[%s1131 + $0x20] sm:$0xff]
    %v1137 = vld [vmem:[%s1131 + $0x28] sm:$0xff]
    %v1138 = vld [vmem:[%s1131 + $0x30] sm:$0xff]
    %v1139 = vld [vmem:[%s1131 + $0x38] sm:$0xff]
    %1140 = vmatprep.subr.mxu0 0.0
    %1141 = vmatpush1.msra.mxu0 0.0
    %1142 = vmatprep.subr.mxu0 0.0
    %1143 = vmatpush1.msra.mxu0 0.0
    %1144 = vmatprep.subr.mxu0 0.0
    %1145 = vmatpush1.msra.mxu0 0.0
    %1146 = vmatprep.subr.mxu0 0.0
    %1147 = vmatpush1.msra.mxu0 0.0
    %1148 = vmatprep.subr.mxu0 0.0
    %1149 = vmatpush1.msra.mxu0 0.0
    %1150 = vmatprep.subr.mxu0 0.0
    %1151 = vmatpush1.msra.mxu0 0.0
    %1152 = vmatprep.subr.mxu0 0.0
    %1153 = vmatpush1.msra.mxu0 0.0
    %1154 = vmatprep.subr.mxu0 0.0
    %1155 = vmatpush1.msra.mxu0 0.0
    %1156 = vmatprep.subr.mxu0 0.0
    %1157 = vmatpush1.msra.mxu0 %v1139
    %1158 = vmatprep.subr.mxu0 0.0
    %1159 = vmatpush1.msra.mxu0 %v1138
    %1160 = vmatprep.subr.mxu0 0.0
    %1161 = vmatpush1.msra.mxu0 %v1137
    %1162 = vmatprep.subr.mxu0 0.0
    %1163 = vmatpush1.msra.mxu0 %v1136
    %1164 = vmatprep.subr.mxu0 0.0
    %1165 = vmatpush1.msra.mxu0 %v1135
    %1166 = vmatprep.subr.mxu0 0.0
    %1167 = vmatpush1.msra.mxu0 %v1134
    %1168 = vmatprep.subr.mxu0 0.0
    %1169 = vmatpush1.msra.mxu0 %v1133
    %1170 = vmatprep.subr.mxu0 0.0
    %1171 = vmatpush1.msra.mxu0 %v1132
    %1172 = vmatprep.subr.mxu0 0.0
    %1173 = vmatpush2.msra.mxu0 0.0
    %1174 = vmatprep.subr.mxu0 0.0
    %1175 = vmatpush2.msra.mxu0 0.0
    %1176 = vmatprep.subr.mxu0 0.0
    %1177 = vmatpush2.msra.mxu0 0.0
    %1178 = vmatprep.subr.mxu0 0.0
    %1179 = vmatpush2.msra.mxu0 0.0
    %1180 = vmatprep.subr.mxu0 0.0
    %1181 = vmatpush2.msra.mxu0 0.0
    %1182 = vmatprep.subr.mxu0 0.0
    %1183 = vmatpush2.msra.mxu0 0.0
    %1184 = vmatprep.subr.mxu0 0.0
    %1185 = vmatpush2.msra.mxu0 0.0
    %1186 = vmatprep.subr.mxu0 0.0
    %1187 = vmatpush2.msra.mxu0 0.0
    %1188 = vmatprep.subr.mxu0 0.0
    %1189 = vmatpush2.msra.mxu0 0.0
    %1190 = vmatprep.subr.mxu0 0.0
    %1191 = vmatpush2.msra.mxu0 0.0
    %1192 = vmatprep.subr.mxu0 0.0
    %1193 = vmatpush2.msra.mxu0 0.0
    %1194 = vmatprep.subr.mxu0 0.0
    %1195 = vmatpush2.msra.mxu0 0.0
    %1196 = vmatprep.subr.mxu0 0.0
    %1197 = vmatpush2.msra.mxu0 0.0
    %1198 = vmatprep.subr.mxu0 0.0
    %1199 = vmatpush2.msra.mxu0 0.0
    %1200 = vmatprep.subr.mxu0 0.0
    %1201 = vmatpush2.msra.mxu0 0.0
    %1202 = vmatprep.subr.mxu0 0.0
    %1203 = vmatpush2.msra.mxu0 0.0
    %1204 = vmatprep.mubr.f32.mxu0 0.0
    %1205 = vmatmul.mubr.f32.gmra.mxu0 %v1049
    %v1206 = vpop.f32.mrf.mxu0
    %v1207 = vadd.f32 0.0, %v1206
    %v1208 = vpop.f32.mrf.mxu0
    %1209 = vmatprep.mubr.f32.mxu0 0.0
    %1210 = vmatmul.mubr.f32.gmra.mxu0 %v1052
    %v1211 = vpop.f32.mrf.mxu0
    %v1212 = vadd.f32 0.0, %v1211
    %v1213 = vpop.f32.mrf.mxu0
    %1214 = vdwg.mxu0
    %1215 = vst.msk [vmem:[#allocation2 + $0x20] sm:$0xff] %vm36, %v1207
    %1216 = vst.msk [vmem:[#allocation2 + $0x30] sm:$0xff] %vm36, %v1212
    %v1217 = vld [vmem:[%s0] sm:$0xff]
    %v1218 = vld [vmem:[%s0 + $0x8] sm:$0xff]
    %v1219 = vld [vmem:[#allocation2] sm:$0xff]
    %v1220 = vld [vmem:[#allocation2 + $0x10] sm:$0xff]
    %v1221 = vld [vmem:[#allocation2 + $0x20] sm:$0xff]
    %v1222 = vld [vmem:[#allocation2 + $0x30] sm:$0xff]
    %v1224 = vsel %vm288, %v1217, 0
    %v1227 = vsel %vm288, %v1218, 0
    %1229 = vmatprep.subr.mxu0 0.0
    %1230 = vmatpush1.msra.mxu0 0.0
    %1231 = vmatprep.subr.mxu0 0.0
    %1232 = vmatpush1.msra.mxu0 0.0
    %1233 = vmatprep.subr.mxu0 0.0
    %1234 = vmatpush1.msra.mxu0 0.0
    %1235 = vmatprep.subr.mxu0 0.0
    %1236 = vmatpush1.msra.mxu0 0.0
    %1237 = vmatprep.subr.mxu0 0.0
    %1238 = vmatpush1.msra.mxu0 0.0
    %1239 = vmatprep.subr.mxu0 0.0
    %1240 = vmatpush1.msra.mxu0 0.0
    %1241 = vmatprep.subr.mxu0 0.0
    %1242 = vmatpush1.msra.mxu0 0.0
    %1243 = vmatprep.subr.mxu0 0.0
    %1244 = vmatpush1.msra.mxu0 0.0
    %1245 = vmatprep.subr.mxu0 0.0
    %1246 = vmatpush1.msra.mxu0 0.0
    %1247 = vmatprep.subr.mxu0 0.0
    %1248 = vmatpush1.msra.mxu0 0.0
    %1249 = vmatprep.subr.mxu0 0.0
    %1250 = vmatpush1.msra.mxu0 0.0
    %1251 = vmatprep.subr.mxu0 0.0
    %1252 = vmatpush1.msra.mxu0 0.0
    %1253 = vmatprep.subr.mxu0 0.0
    %1254 = vmatpush1.msra.mxu0 %v1222
    %1255 = vmatprep.subr.mxu0 0.0
    %1256 = vmatpush1.msra.mxu0 %v1221
    %1257 = vmatprep.subr.mxu0 0.0
    %1258 = vmatpush1.msra.mxu0 %v1220
    %1259 = vmatprep.subr.mxu0 0.0
    %1260 = vmatpush1.msra.mxu0 %v1219
    %1261 = vmatprep.subr.mxu0 0.0
    %1262 = vmatpush2.msra.mxu0 0.0
    %1263 = vmatprep.subr.mxu0 0.0
    %1264 = vmatpush2.msra.mxu0 0.0
    %1265 = vmatprep.subr.mxu0 0.0
    %1266 = vmatpush2.msra.mxu0 0.0
    %1267 = vmatprep.subr.mxu0 0.0
    %1268 = vmatpush2.msra.mxu0 0.0
    %1269 = vmatprep.subr.mxu0 0.0
    %1270 = vmatpush2.msra.mxu0 0.0
    %1271 = vmatprep.subr.mxu0 0.0
    %1272 = vmatpush2.msra.mxu0 0.0
    %1273 = vmatprep.subr.mxu0 0.0
    %1274 = vmatpush2.msra.mxu0 0.0
    %1275 = vmatprep.subr.mxu0 0.0
    %1276 = vmatpush2.msra.mxu0 0.0
    %1277 = vmatprep.subr.mxu0 0.0
    %1278 = vmatpush2.msra.mxu0 0.0
    %1279 = vmatprep.subr.mxu0 0.0
    %1280 = vmatpush2.msra.mxu0 0.0
    %1281 = vmatprep.subr.mxu0 0.0
    %1282 = vmatpush2.msra.mxu0 0.0
    %1283 = vmatprep.subr.mxu0 0.0
    %1284 = vmatpush2.msra.mxu0 0.0
    %1285 = vmatprep.subr.mxu0 0.0
    %1286 = vmatpush2.msra.mxu0 0.0
    %1287 = vmatprep.subr.mxu0 0.0
    %1288 = vmatpush2.msra.mxu0 0.0
    %1289 = vmatprep.subr.mxu0 0.0
    %1290 = vmatpush2.msra.mxu0 0.0
    %1291 = vmatprep.subr.mxu0 0.0
    %1292 = vmatpush2.msra.mxu0 0.0
    %1293 = vmatprep.mubr.f32.mxu0 0.0
    %1294 = vmatmul.mubr.f32.gmra.mxu0 %v1224
    %v1295 = vpop.f32.mrf.mxu0
    %v1296 = vadd.f32 %v1017, %v1295
    %v1297 = vpop.f32.mrf.mxu0
    %1298 = vmatprep.mubr.f32.mxu0 0.0
    %1299 = vmatmul.mubr.f32.gmra.mxu0 %v1227
    %v1300 = vpop.f32.mrf.mxu0
    %v1301 = vadd.f32 %v1023, %v1300
    %v1302 = vpop.f32.mrf.mxu0
    %1303 = vdwg.mxu0
    %v1304 = vtanh.pop %v1296
    %v1305 = vtanh.pop %v1301
    %v1306 = vmul.f32 %v1034, %v684
    %v1307 = vmul.f32 %v1036, %v686
    %v1308 = vsub.f32 1.0, %v1034
    %v1309 = vsub.f32 1.0, %v1036
    %1312 = vrot.lane.b32.xlu0 %v1304, 64
    %v1313 = vpop.permute.xlu0 %1312
    %1314 = vrot.lane.b32.xlu0 %v1305, 64
    %v1315 = vpop.permute.xlu0 %1314
    %v1318 = vmul.f32 %v1308, %v1313
    %v1319 = vmul.f32 %v1309, %v1315
    %v1320 = vadd.f32 %v1306, %v1318
    %v1321 = vadd.f32 %v1307, %v1319
    %1324 = vrot.lane.b32.xlu0 %v1320, 64
    %v1325 = vpop.permute.xlu0 %1324
    %1326 = vrot.lane.b32.xlu0 %v1321, 64
    %v1327 = vpop.permute.xlu0 %1326
    %s1330 = scalar_lea.vmem [#allocation3], 16
    %1331 = vst.msk [vmem:[%s1330] sm:$0xff] %vm36, %v1325
    %1332 = vst.msk [vmem:[%s1330 + $0x8] sm:$0xff] %vm36, %v1327
    // Predicated region
    $region26: #{tpu_custom_call.1} parent=1 // pred_check
      _
    $region27: #{tpu_custom_call.1} parent=1 // pred_check_branch
      %1334 = sbr.rel (0) target = $region29
    $region28: #{tpu_custom_call.1} parent=1 // pred_region
      %s1336 = ssub.s32 512, 512
      %1337 = vsyncadd [#allocation4], %s1336
      %s1338 = sshll.u32 [#allocation3], 4
      %s1339 = int_to_ptr.vmem [resolvable:$true] %s1338
      %1344 = dma.vmem_to_hbm [thread:$0]  %s1339, 512, %s6, [#allocation4], 128, 128, 8
    $region29: #{tpu_custom_call.1} parent=1 // pred_fallthru
      _
    // Predicated region
    $region30: #{tpu_custom_call.1} parent=1 // pred_check
      _
    $region31: #{tpu_custom_call.1} parent=1 // pred_check_branch
      %1346 = sbr.rel (0) target = $region33
    $region32: #{tpu_custom_call.1} parent=1 // pred_region
      %1347 = dma.done [#allocation4], 512
    $region33: #{tpu_custom_call.1} parent=1 // pred_fallthru
      _
    %1348 = vsyncpa [#allocation4], 1

</llo_original>
